<compile_context>
chip_gen: v5e
topology: v5e:2x2
jax: 0.10.0
libtpu: 0.0.40
codegen_flags: <defaults>
</compile_context>

<pallas_src>
import functools

import jax
import jax.numpy as jnp
from jax.experimental import pallas as pl
from jax.experimental.pallas import tpu as pltpu


# ---------------------------------------------------------------------------
# VMEM budgeting helpers
# ---------------------------------------------------------------------------
def _vmem_capacity_bytes():
    try:
        return int(pltpu.get_tpu_info().vmem_capacity_bytes)
    except Exception:
        return 64 * 1024 * 1024          # conservative (v7x per-TC VMEM)


def _pick_tile_h(H, W, per_row_bytes, fixed_bytes, budget):
    """Largest divisor th of H (with (th*W) % 8 == 0 unless th == H) whose per-step
    working set (double-buffered streaming tiles + resident blocks) fits the budget."""
    valid = [th for th in range(H, 0, -1)
             if H % th == 0 and (th == H or (th * W) % 8 == 0)]
    for th in valid:
        if fixed_bytes + 2 * th * per_row_bytes <= budget:
            return th
    return valid[-1]


# ---------------------------------------------------------------------------
# Fused kernel: conv (bf16 MXU) + GroupNorm stats + in-kernel finalize
#               + (scale+1)/shift affine + SiLU.  The per-batch output block is
#               resident across the H-tile axis and doubles as the y buffer.
# ---------------------------------------------------------------------------
def _fused_block_kernel(x_ref, w_ref, b_ref, g_ref, mg_ref, ag_ref, o_ref,
                        s1_ref, s2_ref, mu0_ref,
                        *, th, w_dim, k, c, taps, inv_n, inv_tm, inv_cpg, eps):
    hi = pl.program_id(1)
    n_ht = pl.num_programs(1)
    tm = th * w_dim

    x = x_ref[0]                                               # (th, W+taps-1, K) bf16
    acc = jnp.dot(x[:, 0:w_dim, :].reshape(tm, k), w_ref[0],
                  preferred_element_type=jnp.float32)
    for tp in range(1, taps):                                  # extra W taps (large C_in path)
        acc = acc + jnp.dot(x[:, tp:tp + w_dim, :].reshape(tm, k), w_ref[tp],
                            preferred_element_type=jnp.float32)
    acc = acc + b_ref[...]                                     # (tm, c) + (1, c) bias

    # Stash this tile's conv output in the resident per-batch output block (VMEM only).
    row0 = pl.multiple_of(hi * tm, 8) if (tm % 8 == 0) else hi * tm
    o_ref[:, pl.ds(row0, tm), :] = acc.reshape(1, tm, c).astype(o_ref.dtype)

    @pl.when(hi == 0)
    def _():
        # Per-GROUP shift (tile-0 group mean) keeps the one-pass stats well conditioned.
        cm = jnp.sum(acc, axis=0, keepdims=True) * inv_tm      # (1, c) per-channel tile mean
        mu0_ref[...] = jnp.dot(cm, g_ref[...],
                               preferred_element_type=jnp.float32) * inv_cpg
        s1_ref[...] = jnp.zeros_like(s1_ref)
        s2_ref[...] = jnp.zeros_like(s2_ref)

    d = acc - mu0_ref[...]                                     # shifted residuals (f32)
    s1_ref[...] += jnp.sum(d, axis=0, keepdims=True)
    s2_ref[...] += jnp.sum(d * d, axis=0, keepdims=True)

    @pl.when(hi == n_ht - 1)
    def _():
        # Group reduction via a tiny block-diagonal 0/1 matrix (broadcasts back per channel).
        sg = jnp.dot(s1_ref[...], g_ref[...], preferred_element_type=jnp.float32)
        ssg = jnp.dot(s2_ref[...], g_ref[...], preferred_element_type=jnp.float32)
        mean_c = sg * inv_n                                    # centered group mean (1, c)
        var = jnp.maximum(ssg * inv_n - mean_c * mean_c, 0.0)
        inv = jax.lax.rsqrt(var + eps)
        mul = inv * mg_ref[...]                                # (1, 1, c): invstd*gamma*(scale+1)
        add = ag_ref[...] - (mean_c + mu0_ref[...]) * mul      # beta*(scale+1)+shift - mean*mul
        y = o_ref[...].astype(jnp.float32)                     # (1, H*W, c) conv output
        t_val = y * mul + add
        o_ref[...] = (t_val * jax.nn.sigmoid(t_val)).astype(o_ref.dtype)


# ---------------------------------------------------------------------------
# Fallback (image too big for VMEM): two-phase path with bf16 intermediate.
# ---------------------------------------------------------------------------
def _conv_stats_kernel(x_ref, w_ref, b_ref, y_ref, s1_ref, s2_ref,
                       *, th, w_dim, k, c, taps):
    tm = th * w_dim
    x = x_ref[0]
    acc = jnp.dot(x[:, 0:w_dim, :].reshape(tm, k), w_ref[0],
                  preferred_element_type=jnp.float32)
    for tp in range(1, taps):
        acc = acc + jnp.dot(x[:, tp:tp + w_dim, :].reshape(tm, k), w_ref[tp],
                            preferred_element_type=jnp.float32)
    acc = acc + b_ref[...]
    y_ref[...] = acc.reshape(1, tm, c).astype(y_ref.dtype)          # bf16 intermediate
    s1_ref[...] = jnp.sum(acc, axis=0, keepdims=True).reshape(1, 1, 1, c)
    s2_ref[...] = jnp.sum(acc * acc, axis=0, keepdims=True).reshape(1, 1, 1, c)


def _norm_act_kernel(y_ref, mul_ref, add_ref, o_ref):
    t = y_ref[...].astype(jnp.float32) * mul_ref[...] + add_ref[...]  # f32 math (v5e-safe)
    o_ref[...] = (t * jax.nn.sigmoid(t)).astype(o_ref.dtype)


# ---------------------------------------------------------------------------
# Wrapper
# ---------------------------------------------------------------------------
def block_forward(x_nhwc, w, b, gamma, beta, scale, shift, *,
                  groups=8, eps=1e-5, tile_h=None, fuse=None, use_im2col=None):
    B, H, W, C_in = x_nhwc.shape
    C_out = w.shape[-1]
    assert w.shape == (3, 3, C_in, C_out)
    assert C_out % groups == 0
    cpg = C_out // groups
    f32 = jnp.float32
    out_dtype = x_nhwc.dtype
    out_itemsize = jnp.dtype(out_dtype).itemsize

    if use_im2col is None:
        # Single-matmul im2col (K=9*C_in, zero in-kernel slicing) only while the inflated
        # input stays small relative to the output; otherwise fold only the kh taps.
        use_im2col = 9 * C_in <= max(2 * C_out, 128)
    taps = 1 if use_im2col else 3
    K = (9 if use_im2col else 3) * C_in

    # ---- per-parameter prep, hoisted out of the kernels (done once) ----
    w32 = w.astype(f32)
    w_mean = jnp.mean(w32, axis=(0, 1, 2), keepdims=True)
    w_var = jnp.mean((w32 - w_mean) ** 2, axis=(0, 1, 2), keepdims=True)
    w_std = (w32 - w_mean) * jax.lax.rsqrt(w_var + eps)         # weight standardization
    if use_im2col:
        w_taps = w_std.reshape(1, K, C_out)                     # [(dh,dw,cin), cout]
    else:
        w_taps = jnp.transpose(w_std, (1, 0, 2, 3)).reshape(3, K, C_out)   # [dw][(dh,cin), cout]
    w_taps = w_taps.astype(jnp.bfloat16)
    b_p = b.astype(f32).reshape(1, C_out)

    sp1 = scale.astype(f32) + 1.0                               # (B, C_out)
    mg = gamma.astype(f32)[None, :] * sp1                       # gamma*(scale+1)
    ag = beta.astype(f32)[None, :] * sp1 + shift.astype(f32)    # beta*(scale+1)+shift

    gi = jnp.arange(C_out) // cpg
    gmat = (gi[:, None] == gi[None, :]).astype(f32)             # (C_out, C_out) group-sum matrix

    # ---- conv input: fold kh (and optionally kw) taps into channels; bf16 MXU operand ----
    xb = jnp.pad(x_nhwc.astype(jnp.bfloat16), ((0, 0), (1, 1), (1, 1), (0, 0)))
    if use_im2col:
        x_in = jnp.concatenate([xb[:, dh:dh + H, dw:dw + W, :]
                                for dh in range(3) for dw in range(3)], axis=-1)
    else:
        x_in = jnp.concatenate([xb[:, dh:dh + H, :, :] for dh in range(3)], axis=-1)
    # x_in: (B, H, W + taps - 1, K) bf16, halo-free along H

    # ---- generation-aware VMEM budgeting (v7x 64 MiB vs v5e/v6e 128 MiB) ----
    phys_vmem = _vmem_capacity_bytes()
    vmem_limit = min(int(phys_vmem * 0.7), 96 * 1024 * 1024)
    budget = phys_vmem // 3

    x_row_bytes = (W + taps - 1) * K * 2
    param_bytes = taps * K * C_out * 2 + C_out * C_out * 4 + 16 * C_out * 4
    out_block_bytes = H * W * C_out * out_itemsize

    if fuse is None:
        fuse = out_block_bytes + param_bytes + 2 * x_row_bytes <= budget

    per_row = x_row_bytes if fuse else (x_row_bytes + W * C_out * (2 + out_itemsize))
    fixed = param_bytes + (out_block_bytes if fuse else 0)
    if tile_h is None:
        tile_h = _pick_tile_h(H, W, per_row, fixed, budget)
    assert H % tile_h == 0
    n_ht = H // tile_h
    TM = tile_h * W
    assert TM % 8 == 0 or n_ht == 1

    conv_flops = 2 * B * H * W * 9 * C_in * C_out

    if fuse:
        kern = functools.partial(
            _fused_block_kernel, th=tile_h, w_dim=W, k=K, c=C_out, taps=taps,
            inv_n=1.0 / float(H * W * cpg), inv_tm=1.0 / float(TM),
            inv_cpg=1.0 / float(cpg), eps=eps)
        cost = pl.CostEstimate(
            flops=int(conv_flops + 12 * B * H * W * C_out),
            transcendentals=int(B * H * W * C_out),
            bytes_accessed=int(x_in.size * 2 + w_taps.size * 2 + gmat.size * 4
                               + (2 * B + 1) * C_out * 4
                               + B * H * W * C_out * out_itemsize))
        out_flat = pl.pallas_call(
            kern,
            out_shape=jax.ShapeDtypeStruct((B, H * W, C_out), out_dtype),
            grid_spec=pltpu.PrefetchScalarGridSpec(
                num_scalar_prefetch=0,
                grid=(B, n_ht),
                in_specs=[
                    pl.BlockSpec((1, tile_h, W + taps - 1, K), lambda bi, hi: (bi, hi, 0, 0)),
                    pl.BlockSpec((taps, K, C_out), lambda bi, hi: (0, 0, 0)),
                    pl.BlockSpec((1, C_out), lambda bi, hi: (0, 0)),
                    pl.BlockSpec((C_out, C_out), lambda bi, hi: (0, 0)),
                    pl.BlockSpec((1, 1, C_out), lambda bi, hi: (bi, 0, 0)),
                    pl.BlockSpec((1, 1, C_out), lambda bi, hi: (bi, 0, 0)),
                ],
                out_specs=pl.BlockSpec((1, H * W, C_out), lambda bi, hi: (bi, 0, 0)),
                scratch_shapes=[pltpu.VMEM((1, C_out), f32),     # s1
                                pltpu.VMEM((1, C_out), f32),     # s2
                                pltpu.VMEM((1, C_out), f32)],    # per-group shift
            ),
            compiler_params=pltpu.CompilerParams(
                dimension_semantics=("parallel", "arbitrary"),
                vmem_limit_bytes=vmem_limit),
            cost_estimate=cost,
        )(x_in, w_taps, b_p, gmat, mg.reshape(B, 1, C_out), ag.reshape(B, 1, C_out))
        return out_flat.reshape(B, H, W, C_out)

    # ------------------- two-kernel fallback (bf16 intermediate) -------------------
    kern_a = functools.partial(_conv_stats_kernel, th=tile_h, w_dim=W, k=K, c=C_out, taps=taps)
    cost_a = pl.CostEstimate(
        flops=int(conv_flops), transcendentals=0,
        bytes_accessed=int(x_in.size * 2 + w_taps.size * 2 + B * H * W * C_out * 2
                           + 2 * B * n_ht * C_out * 4))
    y, s1, s2 = pl.pallas_call(
        kern_a,
        out_shape=(jax.ShapeDtypeStruct((B, H * W, C_out), jnp.bfloat16),
                   jax.ShapeDtypeStruct((B, n_ht, 1, C_out), f32),
                   jax.ShapeDtypeStruct((B, n_ht, 1, C_out), f32)),
        grid_spec=pltpu.PrefetchScalarGridSpec(
            num_scalar_prefetch=0, grid=(B, n_ht),
            in_specs=[
                pl.BlockSpec((1, tile_h, W + taps - 1, K), lambda bi, hi: (bi, hi, 0, 0)),
                pl.BlockSpec((taps, K, C_out), lambda bi, hi: (0, 0, 0)),
                pl.BlockSpec((1, C_out), lambda bi, hi: (0, 0)),
            ],
            out_specs=[
                pl.BlockSpec((1, TM, C_out), lambda bi, hi: (bi, hi, 0)),
                pl.BlockSpec((1, 1, 1, C_out), lambda bi, hi: (bi, hi, 0, 0)),
                pl.BlockSpec((1, 1, 1, C_out), lambda bi, hi: (bi, hi, 0, 0)),
            ],
        ),
        compiler_params=pltpu.CompilerParams(
            dimension_semantics=("parallel", "parallel"),
            vmem_limit_bytes=vmem_limit),
        cost_estimate=cost_a,
    )(x_in, w_taps, b_p)

    # tiny O(B*C) GroupNorm finalization + affine folding (plain JAX)
    n = float(H * W * cpg)
    S = jnp.sum(s1, axis=(1, 2))                                # (B, C_out)
    SS = jnp.sum(s2, axis=(1, 2))
    gS = S.reshape(B, groups, cpg).sum(-1)
    gSS = SS.reshape(B, groups, cpg).sum(-1)
    mean_g = gS / n
    var_g = jnp.maximum(gSS / n - mean_g * mean_g, 0.0)         # biased var (matches PyTorch)
    inv_g = jax.lax.rsqrt(var_g + eps)
    mean_c = jnp.repeat(mean_g, cpg, axis=-1)
    inv_c = jnp.repeat(inv_g, cpg, axis=-1)
    mul2 = inv_c * mg                                           # (B, C_out)
    add2 = ag - mean_c * mul2
    mul_p = mul2.reshape(B, 1, C_out)
    add_p = add2.reshape(B, 1, C_out)

    cost_b = pl.CostEstimate(
        flops=int(6 * B * H * W * C_out), transcendentals=int(B * H * W * C_out),
        bytes_accessed=int(B * H * W * C_out * (2 + out_itemsize) + 2 * B * C_out * 4))
    out_flat = pl.pallas_call(
        _norm_act_kernel,
        out_shape=jax.ShapeDtypeStruct((B, H * W, C_out), out_dtype),
        grid_spec=pltpu.PrefetchScalarGridSpec(
            num_scalar_prefetch=0, grid=(B, n_ht),
            in_specs=[
                pl.BlockSpec((1, TM, C_out), lambda bi, hi: (bi, hi, 0)),
                pl.BlockSpec((1, 1, C_out), lambda bi, hi: (bi, 0, 0)),
                pl.BlockSpec((1, 1, C_out), lambda bi, hi: (bi, 0, 0)),
            ],
            out_specs=pl.BlockSpec((1, TM, C_out), lambda bi, hi: (bi, hi, 0)),
        ),
        compiler_params=pltpu.CompilerParams(
            dimension_semantics=("parallel", "parallel"),
            vmem_limit_bytes=vmem_limit),
        cost_estimate=cost_b,
    )(y, mul_p, add_p)
    return out_flat.reshape(B, H, W, C_out)


# ---------------------------------------------------------------------------
# Pure-JAX f32 reference (matches PyTorch Block.forward)
# ---------------------------------------------------------------------------
def ref_block(x_nhwc, w, b, gamma, beta, scale, shift, *, groups=8):
    eps = 1e-5
    wm = jnp.mean(w, axis=(0, 1, 2), keepdims=True)
    wv = jnp.mean((w - wm) ** 2, axis=(0, 1, 2), keepdims=True)
    wn = (w - wm) * jax.lax.rsqrt(wv + eps)
    y = jax.lax.conv_general_dilated(
        x_nhwc, wn, (1, 1), 'SAME',
        dimension_numbers=('NHWC', 'HWIO', 'NHWC'),
        precision=jax.lax.Precision.HIGHEST) + b
    B, H, W, C = y.shape
    cpg = C // groups
    yg = y.reshape(B, H, W, groups, cpg)
    m = jnp.mean(yg, axis=(1, 2, 4), keepdims=True)
    v = jnp.mean((yg - m) ** 2, axis=(1, 2, 4), keepdims=True)
    yn = ((yg - m) * jax.lax.rsqrt(v + eps)).reshape(B, H, W, C)
    yn = yn * gamma + beta
    yn = yn * (scale[:, None, None, :] + 1.0) + shift[:, None, None, :]
    return yn * jax.nn.sigmoid(yn)


if __name__ == "__main__":
    key = jax.random.PRNGKey(0)
    B, H, W = 2, 16, 16
    dim, dim_out, groups = 4, 32, 8

    ks = jax.random.split(key, 7)
    x_nchw = jax.random.normal(ks[0], (B, dim, H, W), jnp.float32)          # PyTorch-style input
    w = 0.2 * jax.random.normal(ks[1], (3, 3, dim, dim_out), jnp.float32)   # HWIO conv weight
    b = 0.1 * jax.random.normal(ks[2], (dim_out,), jnp.float32)             # conv bias
    gamma = 1.0 + 0.1 * jax.random.normal(ks[3], (dim_out,), jnp.float32)   # GroupNorm weight
    beta = 0.1 * jax.random.normal(ks[4], (dim_out,), jnp.float32)          # GroupNorm bias
    scale = 0.1 * jax.random.normal(ks[5], (B, dim_out), jnp.float32)       # scale_shift[0]
    shift = 0.1 * jax.random.normal(ks[6], (B, dim_out), jnp.float32)       # scale_shift[1]

    x_nhwc = jnp.transpose(x_nchw, (0, 2, 3, 1))
    ref = ref_block(x_nhwc, w, b, gamma, beta, scale, shift, groups=groups)

    # tile_h=8 exercises the multi-H-tile accumulation path (grid = (B, 2))
    fwd_fused = jax.jit(functools.partial(block_forward, groups=groups, tile_h=8))
    fwd_taps3 = jax.jit(functools.partial(block_forward, groups=groups, tile_h=8,
                                          use_im2col=False))
    fwd_fallb = jax.jit(functools.partial(block_forward, groups=groups, tile_h=8,
                                          fuse=False))

    out1 = jax.block_until_ready(fwd_fused(x_nhwc, w, b, gamma, beta, scale, shift))
    out2 = jax.block_until_ready(fwd_taps3(x_nhwc, w, b, gamma, beta, scale, shift))
    out3 = jax.block_until_ready(fwd_fallb(x_nhwc, w, b, gamma, beta, scale, shift))

    for out in (out1, out2, out3):
        assert out.shape == (B, H, W, dim_out)
        max_err = float(jnp.max(jnp.abs(out - ref)))
        # bf16 MXU operands (f32 accumulation) vs an all-f32 HIGHEST reference
        assert max_err < 5e-2, f"max abs error too large: {max_err}"

    print("KERNEL_OK")
</pallas_src>

<mosaic_0001>
module attributes {stable_mosaic.version = 11 : i64} {
  func.func @_fused_block_kernel(%arg0: i32, %arg1: i32, %arg2: memref<1x8x16x36xbf16, #tpu.memory_space<vmem>>, %arg3: memref<1x36x32xbf16, #tpu.memory_space<vmem>>, %arg4: memref<1x32xf32, #tpu.memory_space<vmem>>, %arg5: memref<32x32xf32, #tpu.memory_space<vmem>>, %arg6: memref<1x1x32xf32, #tpu.memory_space<vmem>>, %arg7: memref<1x1x32xf32, #tpu.memory_space<vmem>>, %arg8: memref<1x256x32xf32, #tpu.memory_space<vmem>>, %arg9: memref<1x32xf32, #tpu.memory_space<vmem>>, %arg10: memref<1x32xf32, #tpu.memory_space<vmem>>, %arg11: memref<1x32xf32, #tpu.memory_space<vmem>>) attributes {dimension_semantics = [#tpu.dimension_semantics<parallel>, #tpu.dimension_semantics<arbitrary>], iteration_bounds = array<i64: 2, 2>, scalar_prefetch = 0 : i64, scratch_operands = 3 : i64, tpu.core_type = #tpu.core_type<tc>, window_params = [{transform_indices = @transform_0, window_bounds = array<i64: 1, 8, 16, 36>}, {pipeline_mode = #tpu.pipeline_mode<synchronous>, transform_indices = @transform_1, window_bounds = array<i64: 1, 36, 32>}, {pipeline_mode = #tpu.pipeline_mode<synchronous>, transform_indices = @transform_2, window_bounds = array<i64: 1, 32>}, {pipeline_mode = #tpu.pipeline_mode<synchronous>, transform_indices = @transform_3, window_bounds = array<i64: 32, 32>}, {transform_indices = @transform_4, window_bounds = array<i64: 1, 1, 32>}, {transform_indices = @transform_5, window_bounds = array<i64: 1, 1, 32>}, {transform_indices = @transform_6, window_bounds = array<i64: 1, 256, 32>}]} {
    %c0 = arith.constant 0 : index
    %c0_0 = arith.constant 0 : index
    %c0_1 = arith.constant 0 : index
    %c0_2 = arith.constant 0 : index
    %0 = vector.load %arg2[%c0, %c0_0, %c0_1, %c0_2] : memref<1x8x16x36xbf16, #tpu.memory_space<vmem>>, vector<1x8x16x36xbf16>
    %1 = vector.shape_cast %0 : vector<1x8x16x36xbf16> to vector<8x16x36xbf16>
    %2 = vector.shape_cast %1 : vector<8x16x36xbf16> to vector<128x36xbf16>
    %c0_3 = arith.constant 0 : index
    %c0_4 = arith.constant 0 : index
    %c0_5 = arith.constant 0 : index
    %3 = vector.load %arg3[%c0_3, %c0_4, %c0_5] : memref<1x36x32xbf16, #tpu.memory_space<vmem>>, vector<1x36x32xbf16>
    %4 = vector.shape_cast %3 : vector<1x36x32xbf16> to vector<36x32xbf16>
    %cst = arith.constant dense<0.000000e+00> : vector<128x32xf32>
    %5 = tpu.matmul %2, %4, %cst {dimension_numbers = #tpu.dot_dimension_numbers<[1], [0], [0], [1], [0, 0, 1, 1], [], []>} : vector<128x36xbf16>, vector<36x32xbf16>, vector<128x32xf32> -> vector<128x32xf32>
    %c0_6 = arith.constant 0 : index
    %c0_7 = arith.constant 0 : index
    %6 = vector.load %arg4[%c0_6, %c0_7] : memref<1x32xf32, #tpu.memory_space<vmem>>, vector<1x32xf32>
    %7 = vector.broadcast %6 : vector<1x32xf32> to vector<128x32xf32>
    %8 = arith.addf %5, %7 : vector<128x32xf32>
    %c128_i32 = arith.constant 128 : i32
    %9 = arith.muli %arg1, %c128_i32 : i32
    %10 = tpu.assume_multiple %9, 8 : i32
    %11 = vector.shape_cast %8 : vector<128x32xf32> to vector<1x128x32xf32>
    %c0_8 = arith.constant 0 : index
    %12 = arith.index_cast %10 : i32 to index
    %c0_9 = arith.constant 0 : index
    %13 = vector.load %arg8[%c0_8, %12, %c0_9] : memref<1x256x32xf32, #tpu.memory_space<vmem>>, vector<1x128x32xf32>
    tpu.vector_store %arg8[%c0_8, %12, %c0_9], %11 {strides = array<i32>} : memref<1x256x32xf32, #tpu.memory_space<vmem>>, vector<1x128x32xf32>,
    %c0_i32 = arith.constant 0 : i32
    %14 = arith.cmpi eq, %arg1, %c0_i32 : i32
    %15 = arith.extui %14 : i1 to i32
    %c0_i32_10 = arith.constant 0 : i32
    %16 = arith.cmpi ne, %15, %c0_i32_10 : i32
    scf.if %16 {
      %cst_24 = arith.constant dense<0.000000e+00> : vector<32xf32>
      %34 = vector.multi_reduction <add>, %8, %cst_24 [0] : vector<128x32xf32> to vector<32xf32>
      %35 = vector.shape_cast %34 : vector<32xf32> to vector<1x32xf32>
      %cst_25 = arith.constant 7.812500e-03 : f32
      %36 = vector.broadcast %cst_25 : f32 to vector<1x32xf32>
      %37 = arith.mulf %35, %36 : vector<1x32xf32>
      %c0_26 = arith.constant 0 : index
      %c0_27 = arith.constant 0 : index
      %38 = vector.load %arg5[%c0_26, %c0_27] : memref<32x32xf32, #tpu.memory_space<vmem>>, vector<32x32xf32>
      %cst_28 = arith.constant dense<0.000000e+00> : vector<1x32xf32>
      %39 = tpu.matmul %37, %38, %cst_28 {dimension_numbers = #tpu.dot_dimension_numbers<[1], [0], [0], [1], [0, 0, 1, 1], [], []>} : vector<1x32xf32>, vector<32x32xf32>, vector<1x32xf32> -> vector<1x32xf32>
      %cst_29 = arith.constant 2.500000e-01 : f32
      %40 = vector.broadcast %cst_29 : f32 to vector<1x32xf32>
      %41 = arith.mulf %39, %40 : vector<1x32xf32>
      %c0_30 = arith.constant 0 : index
      %c0_31 = arith.constant 0 : index
      %42 = vector.load %arg11[%c0_30, %c0_31] : memref<1x32xf32, #tpu.memory_space<vmem>>, vector<1x32xf32>
      tpu.vector_store %arg11[%c0_30, %c0_31], %41 {strides = array<i32>} : memref<1x32xf32, #tpu.memory_space<vmem>>, vector<1x32xf32>,
      %cst_32 = arith.constant 0.000000e+00 : f32
      %43 = vector.broadcast %cst_32 : f32 to vector<1x32xf32>
      %c0_33 = arith.constant 0 : index
      %c0_34 = arith.constant 0 : index
      %44 = vector.load %arg9[%c0_33, %c0_34] : memref<1x32xf32, #tpu.memory_space<vmem>>, vector<1x32xf32>
      tpu.vector_store %arg9[%c0_33, %c0_34], %43 {strides = array<i32>} : memref<1x32xf32, #tpu.memory_space<vmem>>, vector<1x32xf32>,
      %cst_35 = arith.constant 0.000000e+00 : f32
      %45 = vector.broadcast %cst_35 : f32 to vector<1x32xf32>
      %c0_36 = arith.constant 0 : index
      %c0_37 = arith.constant 0 : index
      %46 = vector.load %arg10[%c0_36, %c0_37] : memref<1x32xf32, #tpu.memory_space<vmem>>, vector<1x32xf32>
      tpu.vector_store %arg10[%c0_36, %c0_37], %45 {strides = array<i32>} : memref<1x32xf32, #tpu.memory_space<vmem>>, vector<1x32xf32>,
    } else {
    }
    %c0_11 = arith.constant 0 : index
    %c0_12 = arith.constant 0 : index
    %17 = vector.load %arg11[%c0_11, %c0_12] : memref<1x32xf32, #tpu.memory_space<vmem>>, vector<1x32xf32>
    %18 = vector.broadcast %17 : vector<1x32xf32> to vector<128x32xf32>
    %19 = arith.subf %8, %18 : vector<128x32xf32>
    %c0_13 = arith.constant 0 : index
    %c0_14 = arith.constant 0 : index
    %20 = vector.load %arg9[%c0_13, %c0_14] : memref<1x32xf32, #tpu.memory_space<vmem>>, vector<1x32xf32>
    %cst_15 = arith.constant dense<0.000000e+00> : vector<32xf32>
    %21 = vector.multi_reduction <add>, %19, %cst_15 [0] : vector<128x32xf32> to vector<32xf32>
    %22 = vector.shape_cast %21 : vector<32xf32> to vector<1x32xf32>
    %23 = arith.addf %20, %22 : vector<1x32xf32>
    %c0_16 = arith.constant 0 : index
    %c0_17 = arith.constant 0 : index
    %24 = vector.load %arg9[%c0_16, %c0_17] : memref<1x32xf32, #tpu.memory_space<vmem>>, vector<1x32xf32>
    tpu.vector_store %arg9[%c0_16, %c0_17], %23 {strides = array<i32>} : memref<1x32xf32, #tpu.memory_space<vmem>>, vector<1x32xf32>,
    %c0_18 = arith.constant 0 : index
    %c0_19 = arith.constant 0 : index
    %25 = vector.load %arg10[%c0_18, %c0_19] : memref<1x32xf32, #tpu.memory_space<vmem>>, vector<1x32xf32>
    %26 = arith.mulf %19, %19 : vector<128x32xf32>
    %cst_20 = arith.constant dense<0.000000e+00> : vector<32xf32>
    %27 = vector.multi_reduction <add>, %26, %cst_20 [0] : vector<128x32xf32> to vector<32xf32>
    %28 = vector.shape_cast %27 : vector<32xf32> to vector<1x32xf32>
    %29 = arith.addf %25, %28 : vector<1x32xf32>
    %c0_21 = arith.constant 0 : index
    %c0_22 = arith.constant 0 : index
    %30 = vector.load %arg10[%c0_21, %c0_22] : memref<1x32xf32, #tpu.memory_space<vmem>>, vector<1x32xf32>
    tpu.vector_store %arg10[%c0_21, %c0_22], %29 {strides = array<i32>} : memref<1x32xf32, #tpu.memory_space<vmem>>, vector<1x32xf32>,
    %c1_i32 = arith.constant 1 : i32
    %31 = arith.cmpi eq, %arg1, %c1_i32 : i32
    %32 = arith.extui %31 : i1 to i32
    %c0_i32_23 = arith.constant 0 : i32
    %33 = arith.cmpi ne, %32, %c0_i32_23 : i32
    scf.if %33 {
      %c0_24 = arith.constant 0 : index
      %c0_25 = arith.constant 0 : index
      %34 = vector.load %arg9[%c0_24, %c0_25] : memref<1x32xf32, #tpu.memory_space<vmem>>, vector<1x32xf32>
      %c0_26 = arith.constant 0 : index
      %c0_27 = arith.constant 0 : index
      %35 = vector.load %arg5[%c0_26, %c0_27] : memref<32x32xf32, #tpu.memory_space<vmem>>, vector<32x32xf32>
      %cst_28 = arith.constant dense<0.000000e+00> : vector<1x32xf32>
      %36 = tpu.matmul %34, %35, %cst_28 {dimension_numbers = #tpu.dot_dimension_numbers<[1], [0], [0], [1], [0, 0, 1, 1], [], []>} : vector<1x32xf32>, vector<32x32xf32>, vector<1x32xf32> -> vector<1x32xf32>
      %c0_29 = arith.constant 0 : index
      %c0_30 = arith.constant 0 : index
      %37 = vector.load %arg10[%c0_29, %c0_30] : memref<1x32xf32, #tpu.memory_space<vmem>>, vector<1x32xf32>
      %c0_31 = arith.constant 0 : index
      %c0_32 = arith.constant 0 : index
      %38 = vector.load %arg5[%c0_31, %c0_32] : memref<32x32xf32, #tpu.memory_space<vmem>>, vector<32x32xf32>
      %cst_33 = arith.constant dense<0.000000e+00> : vector<1x32xf32>
      %39 = tpu.matmul %37, %38, %cst_33 {dimension_numbers = #tpu.dot_dimension_numbers<[1], [0], [0], [1], [0, 0, 1, 1], [], []>} : vector<1x32xf32>, vector<32x32xf32>, vector<1x32xf32> -> vector<1x32xf32>
      %cst_34 = arith.constant 9.765625E-4 : f32
      %40 = vector.broadcast %cst_34 : f32 to vector<1x32xf32>
      %41 = arith.mulf %36, %40 : vector<1x32xf32>
      %cst_35 = arith.constant 9.765625E-4 : f32
      %42 = vector.broadcast %cst_35 : f32 to vector<1x32xf32>
      %43 = arith.mulf %39, %42 : vector<1x32xf32>
      %44 = arith.mulf %41, %41 : vector<1x32xf32>
      %45 = arith.subf %43, %44 : vector<1x32xf32>
      %cst_36 = arith.constant 0.000000e+00 : f32
      %46 = vector.broadcast %cst_36 : f32 to vector<1x32xf32>
      %47 = arith.maximumf %45, %46 : vector<1x32xf32>
      %cst_37 = arith.constant 9.99999974E-6 : f32
      %48 = vector.broadcast %cst_37 : f32 to vector<1x32xf32>
      %49 = arith.addf %47, %48 : vector<1x32xf32>
      %50 = math.rsqrt %49 : vector<1x32xf32>
      %c0_38 = arith.constant 0 : index
      %c0_39 = arith.constant 0 : index
      %c0_40 = arith.constant 0 : index
      %51 = vector.load %arg6[%c0_38, %c0_39, %c0_40] : memref<1x1x32xf32, #tpu.memory_space<vmem>>, vector<1x1x32xf32>
      %52 = vector.shape_cast %50 : vector<1x32xf32> to vector<1x1x32xf32>
      %53 = arith.mulf %52, %51 : vector<1x1x32xf32>
      %c0_41 = arith.constant 0 : index
      %c0_42 = arith.constant 0 : index
      %c0_43 = arith.constant 0 : index
      %54 = vector.load %arg7[%c0_41, %c0_42, %c0_43] : memref<1x1x32xf32, #tpu.memory_space<vmem>>, vector<1x1x32xf32>
      %c0_44 = arith.constant 0 : index
      %c0_45 = arith.constant 0 : index
      %55 = vector.load %arg11[%c0_44, %c0_45] : memref<1x32xf32, #tpu.memory_space<vmem>>, vector<1x32xf32>
      %56 = arith.addf %41, %55 : vector<1x32xf32>
      %57 = vector.shape_cast %56 : vector<1x32xf32> to vector<1x1x32xf32>
      %58 = arith.mulf %57, %53 : vector<1x1x32xf32>
      %59 = arith.subf %54, %58 : vector<1x1x32xf32>
      %c0_46 = arith.constant 0 : index
      %c0_47 = arith.constant 0 : index
      %c0_48 = arith.constant 0 : index
      %60 = vector.load %arg8[%c0_46, %c0_47, %c0_48] : memref<1x256x32xf32, #tpu.memory_space<vmem>>, vector<1x256x32xf32>
      %61 = vector.broadcast %53 : vector<1x1x32xf32> to vector<1x256x32xf32>
      %62 = arith.mulf %60, %61 : vector<1x256x32xf32>
      %63 = vector.broadcast %59 : vector<1x1x32xf32> to vector<1x256x32xf32>
      %64 = arith.addf %62, %63 : vector<1x256x32xf32>
      %65 = arith.negf %64 : vector<1x256x32xf32>
      %66 = math.exp %65 : vector<1x256x32xf32>
      %cst_49 = arith.constant 1.000000e+00 : f32
      %67 = vector.broadcast %cst_49 : f32 to vector<1x256x32xf32>
      %68 = arith.addf %67, %66 : vector<1x256x32xf32>
      %69 = arith.divf %67, %68 : vector<1x256x32xf32>
      %70 = arith.mulf %64, %69 : vector<1x256x32xf32>
      %c0_50 = arith.constant 0 : index
      %c0_51 = arith.constant 0 : index
      %c0_52 = arith.constant 0 : index
      %71 = vector.load %arg8[%c0_50, %c0_51, %c0_52] : memref<1x256x32xf32, #tpu.memory_space<vmem>>, vector<1x256x32xf32>
      tpu.vector_store %arg8[%c0_50, %c0_51, %c0_52], %70 {strides = array<i32>} : memref<1x256x32xf32, #tpu.memory_space<vmem>>, vector<1x256x32xf32>,
    } else {
    }
    return
  }
  func.func @transform_0(%arg0: i32, %arg1: i32) -> (i32, i32, i32, i32) {
    %c0_i32 = arith.constant 0 : i32
    %c0_i32_0 = arith.constant 0 : i32
    %c0_i32_1 = arith.constant 0 : i32
    return %arg0, %arg1, %c0_i32, %c0_i32_0 : i32, i32, i32, i32
  }
  func.func @transform_1(%arg0: i32, %arg1: i32) -> (i32, i32, i32) {
    %c0_i32 = arith.constant 0 : i32
    %c0_i32_0 = arith.constant 0 : i32
    %c0_i32_1 = arith.constant 0 : i32
    %c0_i32_2 = arith.constant 0 : i32
    return %c0_i32, %c0_i32_0, %c0_i32_1 : i32, i32, i32
  }
  func.func @transform_2(%arg0: i32, %arg1: i32) -> (i32, i32) {
    %c0_i32 = arith.constant 0 : i32
    %c0_i32_0 = arith.constant 0 : i32
    %c0_i32_1 = arith.constant 0 : i32
    return %c0_i32, %c0_i32_0 : i32, i32
  }
  func.func @transform_3(%arg0: i32, %arg1: i32) -> (i32, i32) {
    %c0_i32 = arith.constant 0 : i32
    %c0_i32_0 = arith.constant 0 : i32
    %c0_i32_1 = arith.constant 0 : i32
    return %c0_i32, %c0_i32_0 : i32, i32
  }
  func.func @transform_4(%arg0: i32, %arg1: i32) -> (i32, i32, i32) {
    %c0_i32 = arith.constant 0 : i32
    %c0_i32_0 = arith.constant 0 : i32
    %c0_i32_1 = arith.constant 0 : i32
    return %arg0, %c0_i32, %c0_i32_0 : i32, i32, i32
  }
  func.func @transform_5(%arg0: i32, %arg1: i32) -> (i32, i32, i32) {
    %c0_i32 = arith.constant 0 : i32
    %c0_i32_0 = arith.constant 0 : i32
    %c0_i32_1 = arith.constant 0 : i32
    return %arg0, %c0_i32, %c0_i32_0 : i32, i32, i32
  }
  func.func @transform_6(%arg0: i32, %arg1: i32) -> (i32, i32, i32) {
    %c0_i32 = arith.constant 0 : i32
    %c0_i32_0 = arith.constant 0 : i32
    %c0_i32_1 = arith.constant 0 : i32
    return %arg0, %c0_i32, %c0_i32_0 : i32, i32, i32
  }
}

</mosaic_0001>

<llo_original>
// kernel: block_forward.1
$region0: #{block_forward.1}
  #allocation0 [shape = 'u32[]', space=smem, size = 0x4, offset = 0x4, fixed_abs, tag = 'smem constant byte address 0x4 - core index']
  #allocation1 [shape = 'u32[72,128]{1,0:T(1,128)}', space=vmem, size = 0x9000, scoped, tag = 'internal scratch']
  #allocation2 [shape = 'f32[1,32]{1,0:T(1,128)}', space=vmem, size = 0x200, scoped, tag = 'scratch operand']
  #allocation3 [shape = 'f32[1,32]{1,0:T(1,128)}', space=vmem, size = 0x200, scoped, tag = 'scratch operand']
  #allocation4 [shape = 'f32[1,32]{1,0:T(1,128)}', space=vmem, size = 0x200, scoped, tag = 'scratch operand']
  %s0 = inlined_call_operand.vmem [shape: bf16[2,16,16,36], index: 0, kind: input, shape index: {}]
  %s1 = inlined_call_operand.vmem [shape: bf16[1,36,32], index: 1, kind: input, shape index: {}]
  %s2 = inlined_call_operand.vmem [shape: f32[1,32], index: 2, kind: input, shape index: {}]
  %s3 = inlined_call_operand.vmem [shape: f32[32,32], index: 3, kind: input, shape index: {}]
  %s4 = inlined_call_operand.vmem [shape: f32[2,1,32], index: 4, kind: input, shape index: {}]
  %s5 = inlined_call_operand.vmem [shape: f32[2,1,32], index: 5, kind: input, shape index: {}]
  %s6 = inlined_call_operand.hbm [shape: f32[2,256,32], index: 6, kind: output, shape index: {}]
  %s7 = sld [smem:[#allocation0]]
  $region65: #{block_forward.1} parent=0
    _
  %s9 = ssub.s32 1, %s7
  %s10 = scalar_select 0, %s9, %s7
  $region1: #{block_forward.1} parent=0
    #allocation5 [shape = 'u8[262144]{0}', space=vmem, size = 0x40000, scoped, tag = 'output window, operand 0']
    #allocation6 [shape = 's32[2]{0}', space=sflag, size = 0x8, scoped, tag = 'scoped memory for block_forward.1']
    %11 = vsyncpa [#allocation6], 0
    %s12 = scalar_lea.sflag [#allocation6], 1
    %13 = vsyncpa %s12, 0
    loop: start=0, step=1, limit=6
    $region2: #{block_forward.1} parent=1 // loop_pre_header
      _
    $region3: #{block_forward.1} parent=1 // loop_header
      %s15 = sphi 0, %s19
      %p16 = scmp.ge.s32.totalorder %s15, 6
      %s22 = sphi 0, %s34
      %s23 = sphi 0, %s30
      %s24 = sphi 0, %s22
      %s25 = sphi 0, %s23
      %s26 = sphi 0, %s24
      %s27 = sphi 0, %s25
      %s39 = sphi 0, %s41
      %s42 = sphi 0, %s39
      %s43 = sphi 0, %s42
      %s59 = sphi 0, %s43
      %s63 = sphi 0, %s63
      %s65 = sphi 0, %s63
      %s66 = sphi 0, %s65
      %s80 = sphi 0, %s66
      %s84 = sphi 0, %s84
      %s86 = sphi 0, %s84
      %s87 = sphi 0, %s86
      %s101 = sphi 0, %s87
      %s105 = sphi 0, %s105
      %s107 = sphi 0, %s105
      %s108 = sphi 0, %s107
      %s122 = sphi 0, %s108
      %s128 = sphi 0, %s130
      %s131 = sphi 0, %s128
      %s132 = sphi 0, %s131
      %s148 = sphi 0, %s132
      %s154 = sphi 0, %s156
      %s157 = sphi 0, %s154
      %s158 = sphi 0, %s157
      %s174 = sphi 0, %s158
      %s180 = sphi 0, %s182
      %s183 = sphi 0, %s180
      %s184 = sphi 0, %s183
      %s200 = sphi 0, %s184
    $region4: #{block_forward.1} parent=1 // loop_header_branch
      %18 = sbr.rel (%p16) target = $region8
    $region5: #{block_forward.1} parent=1 // loop_body
      %s20 = ssub.s32 %s15, 1
      %s21 = ssub.s32 %s15, 2
      %s28 = sadd.s32 1, %s23
      %p29 = scmp.ge.s32.totalorder %s28, 2
      %s30 = scalar_select %p29, 0, %s28
      %s31 = sadd.s32 1, %s22
      %s32 = scalar_select %p29, %s31, %s22
      %p33 = scmp.ge.s32.totalorder %s32, 2
      %s34 = scalar_select %p33, 0, %s32
      %s35 = ssub.s32 %s22, %s34
      %s36 = ssub.s32 %s23, %s30
      %s37 = sor.u32 %s35, %s36
      %p38 = scmp.eq.s32.totalorder %s37, 0
      %s40 = sadd.s32 %s39, 1
      %s41 = scalar_select %p38, %s39, %s40
      %p44 = pneg %p38
      %p45 = scmp.eq.s32.totalorder %s15, 3
      %p46 = por %p44, %p45
      %p47 = scmp.ne.s32.totalorder %s39, %s42
      %p48 = scmp.eq.s32.totalorder %s15, 0
      %p49 = por %p47, %p48
      %p50 = scmp.ne.s32.totalorder %s39, %s42
      %p51 = scmp.eq.s32.totalorder %s20, 3
      %p52 = por %p50, %p51
      %p53 = scmp.ne.s32.totalorder %s42, %s43
      %p54 = scmp.eq.s32.totalorder %s20, 0
      %p55 = por %p53, %p54
      %p56 = scmp.ne.s32.totalorder %s42, %s43
      %p57 = scmp.eq.s32.totalorder %s21, 3
      %p58 = por %p56, %p57
      %p60 = scmp.ne.s32.totalorder %s43, %s59
      %p61 = scmp.eq.s32.totalorder %s21, 0
      %p62 = por %p60, %p61
      %s64 = sadd.s32 %s63, 1
      %p67 = scmp.eq.s32.totalorder %s15, 3
      %p68 = scmp.ne.s32.totalorder %s63, %s65
      %p69 = scmp.eq.s32.totalorder %s15, 0
      %p70 = por %p68, %p69
      %p71 = scmp.ne.s32.totalorder %s63, %s65
      %p72 = scmp.eq.s32.totalorder %s20, 3
      %p73 = por %p71, %p72
      %p74 = scmp.ne.s32.totalorder %s65, %s66
      %p75 = scmp.eq.s32.totalorder %s20, 0
      %p76 = por %p74, %p75
      %p77 = scmp.ne.s32.totalorder %s65, %s66
      %p78 = scmp.eq.s32.totalorder %s21, 3
      %p79 = por %p77, %p78
      %p81 = scmp.ne.s32.totalorder %s66, %s80
      %p82 = scmp.eq.s32.totalorder %s21, 0
      %p83 = por %p81, %p82
      %s85 = sadd.s32 %s84, 1
      %p88 = scmp.eq.s32.totalorder %s15, 3
      %p89 = scmp.ne.s32.totalorder %s84, %s86
      %p90 = scmp.eq.s32.totalorder %s15, 0
      %p91 = por %p89, %p90
      %p92 = scmp.ne.s32.totalorder %s84, %s86
      %p93 = scmp.eq.s32.totalorder %s20, 3
      %p94 = por %p92, %p93
      %p95 = scmp.ne.s32.totalorder %s86, %s87
      %p96 = scmp.eq.s32.totalorder %s20, 0
      %p97 = por %p95, %p96
      %p98 = scmp.ne.s32.totalorder %s86, %s87
      %p99 = scmp.eq.s32.totalorder %s21, 3
      %p100 = por %p98, %p99
      %p102 = scmp.ne.s32.totalorder %s87, %s101
      %p103 = scmp.eq.s32.totalorder %s21, 0
      %p104 = por %p102, %p103
      %s106 = sadd.s32 %s105, 1
      %p109 = scmp.eq.s32.totalorder %s15, 3
      %p110 = scmp.ne.s32.totalorder %s105, %s107
      %p111 = scmp.eq.s32.totalorder %s15, 0
      %p112 = por %p110, %p111
      %p113 = scmp.ne.s32.totalorder %s105, %s107
      %p114 = scmp.eq.s32.totalorder %s20, 3
      %p115 = por %p113, %p114
      %p116 = scmp.ne.s32.totalorder %s107, %s108
      %p117 = scmp.eq.s32.totalorder %s20, 0
      %p118 = por %p116, %p117
      %p119 = scmp.ne.s32.totalorder %s107, %s108
      %p120 = scmp.eq.s32.totalorder %s21, 3
      %p121 = por %p119, %p120
      %p123 = scmp.ne.s32.totalorder %s108, %s122
      %p124 = scmp.eq.s32.totalorder %s21, 0
      %p125 = por %p123, %p124
      %s126 = ssub.s32 %s22, %s34
      %p127 = scmp.eq.s32.totalorder %s126, 0
      %s129 = sadd.s32 %s128, 1
      %s130 = scalar_select %p127, %s128, %s129
      %p133 = pneg %p127
      %p134 = scmp.eq.s32.totalorder %s15, 3
      %p135 = por %p133, %p134
      %p136 = scmp.ne.s32.totalorder %s128, %s131
      %p137 = scmp.eq.s32.totalorder %s15, 0
      %p138 = por %p136, %p137
      %p139 = scmp.ne.s32.totalorder %s128, %s131
      %p140 = scmp.eq.s32.totalorder %s20, 3
      %p141 = por %p139, %p140
      %p142 = scmp.ne.s32.totalorder %s131, %s132
      %p143 = scmp.eq.s32.totalorder %s20, 0
      %p144 = por %p142, %p143
      %p145 = scmp.ne.s32.totalorder %s131, %s132
      %p146 = scmp.eq.s32.totalorder %s21, 3
      %p147 = por %p145, %p146
      %p149 = scmp.ne.s32.totalorder %s132, %s148
      %p150 = scmp.eq.s32.totalorder %s21, 0
      %p151 = por %p149, %p150
      %s152 = ssub.s32 %s22, %s34
      %p153 = scmp.eq.s32.totalorder %s152, 0
      %s155 = sadd.s32 %s154, 1
      %s156 = scalar_select %p153, %s154, %s155
      %p159 = pneg %p153
      %p160 = scmp.eq.s32.totalorder %s15, 3
      %p161 = por %p159, %p160
      %p162 = scmp.ne.s32.totalorder %s154, %s157
      %p163 = scmp.eq.s32.totalorder %s15, 0
      %p164 = por %p162, %p163
      %p165 = scmp.ne.s32.totalorder %s154, %s157
      %p166 = scmp.eq.s32.totalorder %s20, 3
      %p167 = por %p165, %p166
      %p168 = scmp.ne.s32.totalorder %s157, %s158
      %p169 = scmp.eq.s32.totalorder %s20, 0
      %p170 = por %p168, %p169
      %p171 = scmp.ne.s32.totalorder %s157, %s158
      %p172 = scmp.eq.s32.totalorder %s21, 3
      %p173 = por %p171, %p172
      %p175 = scmp.ne.s32.totalorder %s158, %s174
      %p176 = scmp.eq.s32.totalorder %s21, 0
      %p177 = por %p175, %p176
      %s178 = ssub.s32 %s22, %s34
      %p179 = scmp.eq.s32.totalorder %s178, 0
      %s181 = sadd.s32 %s180, 1
      %s182 = scalar_select %p179, %s180, %s181
      %p185 = pneg %p179
      %p186 = scmp.eq.s32.totalorder %s15, 3
      %p187 = por %p185, %p186
      %p188 = scmp.ne.s32.totalorder %s180, %s183
      %p189 = scmp.eq.s32.totalorder %s15, 0
      %p190 = por %p188, %p189
      %p191 = scmp.ne.s32.totalorder %s180, %s183
      %p192 = scmp.eq.s32.totalorder %s20, 3
      %p193 = por %p191, %p192
      %p194 = scmp.ne.s32.totalorder %s183, %s184
      %p195 = scmp.eq.s32.totalorder %s20, 0
      %p196 = por %p194, %p195
      %p197 = scmp.ne.s32.totalorder %s183, %s184
      %p198 = scmp.eq.s32.totalorder %s21, 3
      %p199 = por %p197, %p198
      %p201 = scmp.ne.s32.totalorder %s184, %s200
      %p202 = scmp.eq.s32.totalorder %s21, 0
      %p203 = por %p201, %p202
      %p204 = scmp.le.s32.totalorder 1, %s15
      %p205 = scmp.lt.s32.totalorder %s15, 5
      %p206 = pnand %p204, %p205
      %p207 = pneg %p206
      // Predicated region
      $region9: #{block_forward.1} parent=5 // pred_check
        _
      $region10: #{block_forward.1} parent=5 // pred_check_branch
        %209 = sbr.rel (%p206) target = $region12
      $region11: #{block_forward.1} parent=5 // pred_region
        %s210 = ssub.s32 %s15, 1
        // Predicated region
        $region13: #{block_forward.1} parent=11 // pred_check
          %p211 = pneg %p76
        $region14: #{block_forward.1} parent=11 // pred_check_branch
          %213 = sbr.rel (%p211) target = $region16
        $region15: #{block_forward.1} parent=11 // pred_region
          _
        $region16: #{block_forward.1} parent=11 // pred_fallthru
          _
        // Predicated region
        $region17: #{block_forward.1} parent=11 // pred_check
          %p214 = pneg %p97
        $region18: #{block_forward.1} parent=11 // pred_check_branch
          %216 = sbr.rel (%p214) target = $region20
        $region19: #{block_forward.1} parent=11 // pred_region
          _
        $region20: #{block_forward.1} parent=11 // pred_fallthru
          _
        // Predicated region
        $region21: #{block_forward.1} parent=11 // pred_check
          %p217 = pneg %p118
        $region22: #{block_forward.1} parent=11 // pred_check_branch
          %219 = sbr.rel (%p217) target = $region24
        $region23: #{block_forward.1} parent=11 // pred_region
          _
        $region24: #{block_forward.1} parent=11 // pred_fallthru
          _
      $region12: #{block_forward.1} parent=5 // pred_fallthru
        _
      %p220 = scmp.lt.s32.totalorder %s15, 4
      // Predicated region
      $region25: #{block_forward.1} parent=5 // pred_check
        %p221 = pneg %p220
      $region26: #{block_forward.1} parent=5 // pred_check_branch
        %223 = sbr.rel (%p221) target = $region28
      $region27: #{block_forward.1} parent=5 // pred_region
        // Predicated region
        $region29: #{block_forward.1} parent=27 // pred_check
          %p224 = pneg %p49
        $region30: #{block_forward.1} parent=27 // pred_check_branch
          %226 = sbr.rel (%p224) target = $region32
        $region31: #{block_forward.1} parent=27 // pred_region
          %s227 = smul.u32 8, %s23
          %p228 = scmp.lt.s32.totalorder %s22, 1
          %s229 = scalar_select %p228, %s22, 1
          %p230 = scmp.lt.s32.totalorder %s227, 15
          %s231 = scalar_select %p230, %s227, 15
          %s232 = smul.addr %s231, 2
          %s233 = smul.addr %s229, 32
          %s234 = sadd.s32 %s232, %s233
          %s235 = smul.addr %s234, 4
          %s236 = scalar_lea.vmem %s0, %s235
          %s237 = smul.u32 8, %s23
        $region32: #{block_forward.1} parent=27 // pred_fallthru
          _
        // Predicated region
        $region33: #{block_forward.1} parent=27 // pred_check
          %p238 = pneg %p138
        $region34: #{block_forward.1} parent=27 // pred_check_branch
          %240 = sbr.rel (%p238) target = $region36
        $region35: #{block_forward.1} parent=27 // pred_region
          %p241 = scmp.lt.s32.totalorder %s22, 1
          %s242 = scalar_select %p241, %s22, 1
          %s243 = scalar_lea.vmem %s4, %s242
        $region36: #{block_forward.1} parent=27 // pred_fallthru
          _
        // Predicated region
        $region37: #{block_forward.1} parent=27 // pred_check
          %p244 = pneg %p164
        $region38: #{block_forward.1} parent=27 // pred_check_branch
          %246 = sbr.rel (%p244) target = $region40
        $region39: #{block_forward.1} parent=27 // pred_region
          %p247 = scmp.lt.s32.totalorder %s22, 1
          %s248 = scalar_select %p247, %s22, 1
          %s249 = scalar_lea.vmem %s5, %s248
        $region40: #{block_forward.1} parent=27 // pred_fallthru
          _
      $region28: #{block_forward.1} parent=5 // pred_fallthru
        _
      %p250 = scmp.le.s32.totalorder 1, %s15
      %p251 = scmp.lt.s32.totalorder %s15, 5
      %p252 = pnand %p250, %p251
      %p253 = pneg %p252
      // Predicated region
      $region41: #{block_forward.1} parent=5 // pred_check
        _
      $region42: #{block_forward.1} parent=5 // pred_check_branch
        %255 = sbr.rel (%p252) target = $region44
      $region43: #{block_forward.1} parent=5 // pred_region
        %s256 = ssub.s32 %s15, 1
        %s257 = smul.u32 8, %s25
        %p258 = scmp.lt.s32.totalorder %s24, 1
        %s259 = scalar_select %p258, %s24, 1
        %p260 = scmp.lt.s32.totalorder %s257, 15
        %s261 = scalar_select %p260, %s257, 15
        %s262 = smul.addr %s261, 2
        %s263 = smul.addr %s259, 32
        %s264 = sadd.s32 %s262, %s263
        %s265 = smul.addr %s264, 4
        %s266 = scalar_lea.vmem %s0, %s265
        %p267 = pneg %p55
        %p268 = pneg %p52
        %p269 = pneg %p76
        %p270 = pneg %p73
        %p271 = pneg %p97
        %p272 = pneg %p94
        %p273 = pneg %p118
        %p274 = pneg %p115
        %p275 = scmp.lt.s32.totalorder %s24, 1
        %s276 = scalar_select %p275, %s24, 1
        %s277 = scalar_lea.vmem %s4, %s276
        %p278 = pneg %p144
        %p279 = pneg %p141
        %p280 = scmp.lt.s32.totalorder %s24, 1
        %s281 = scalar_select %p280, %s24, 1
        %s282 = scalar_lea.vmem %s5, %s281
        %p283 = pneg %p170
        %p284 = pneg %p167
        %p285 = pneg %p196
        %p286 = pneg %p193
        %s287 = sand.u32 %s183, 1
        %s288 = scalar_lea.sflag [#allocation6], %s287
        %s289 = sand.u32 %s183, 1
        %s290 = smul.addr %s289, 256
        %s291 = scalar_lea.vmem [#allocation5], %s290
        %s292 = smul.u32 8, %s25
        %p293 = scmp.lt.s32.totalorder %s24, 1
        %s294 = scalar_select %p293, %s24, 1
        %p295 = scmp.lt.s32.totalorder %s292, 15
        %s296 = scalar_select %p295, %s292, 15
        %s297 = smul.addr %s296, 2
        %s298 = smul.addr %s294, 32
        %s299 = sadd.s32 %s297, %s298
        %s300 = smul.addr %s299, 4
        %s301 = scalar_lea.vmem %s0, %s300
        %s302 = smul.u32 8, %s25
        %p303 = scmp.lt.s32.totalorder %s24, 1
        %s304 = scalar_select %p303, %s24, 1
        %s305 = scalar_lea.vmem %s4, %s304
        %p306 = scmp.lt.s32.totalorder %s24, 1
        %s307 = scalar_select %p306, %s24, 1
        %s308 = scalar_lea.vmem %s5, %s307
        %v310 = vld [vmem:[%s301] sm:$0xf]
        %v311 = vld [vmem:[%s301 + $0x4] sm:$0xf]
        %v312 = vld [vmem:[%s301 + $0x8] sm:$0xf]
        %v313 = vld [vmem:[%s301 + $0xc] sm:$0xf]
        %v314 = vld [vmem:[%s301 + $0x10] sm:$0xf]
        %v315 = vld [vmem:[%s301 + $0x14] sm:$0xf]
        %v316 = vld [vmem:[%s301 + $0x18] sm:$0xf]
        %v317 = vld [vmem:[%s301 + $0x1c] sm:$0xf]
        %v318 = vld [vmem:[%s301 + $0x20] sm:$0xf]
        %v319 = vld [vmem:[%s301 + $0x24] sm:$0xf]
        %v320 = vld [vmem:[%s301 + $0x28] sm:$0xf]
        %v321 = vld [vmem:[%s301 + $0x2c] sm:$0xf]
        %v322 = vld [vmem:[%s301 + $0x30] sm:$0xf]
        %v323 = vld [vmem:[%s301 + $0x34] sm:$0xf]
        %v324 = vld [vmem:[%s301 + $0x38] sm:$0xf]
        %v325 = vld [vmem:[%s301 + $0x3c] sm:$0xf]
        %v326 = vld [vmem:[%s1] sm:$0xf]
        %v327 = vld [vmem:[%s1 + $0x4] sm:$0xf]
        %v328 = vld [vmem:[%s1 + $0x8] sm:$0xf]
        %v329 = vld [vmem:[%s1 + $0xc] sm:$0xf]
        %v330 = vld [vmem:[%s1 + $0x10] sm:$0x3]
        %v331 = vld [vmem:[%s2] sm:$0x1]
        %v333 = vperm.slane %v331, 0
        %v351 = vunpack.c.l.b16 %v310
        %v352 = vunpack.c.l.b16 %v311
        %v353 = vunpack.c.l.b16 %v312
        %v354 = vunpack.c.l.b16 %v313
        %v355 = vunpack.c.l.b16 %v314
        %v356 = vunpack.c.l.b16 %v315
        %v357 = vunpack.c.l.b16 %v316
        %v358 = vunpack.c.l.b16 %v317
        %v359 = vunpack.c.l.b16 %v318
        %v360 = vunpack.c.l.b16 %v319
        %v361 = vunpack.c.l.b16 %v320
        %v362 = vunpack.c.l.b16 %v321
        %v363 = vunpack.c.l.b16 %v322
        %v364 = vunpack.c.l.b16 %v323
        %v365 = vunpack.c.l.b16 %v324
        %v366 = vunpack.c.l.b16 %v325
        %v367 = vpack.c.b16 %v352, %v351
        %v368 = vpack.c.b16 %v354, %v353
        %v369 = vpack.c.b16 %v356, %v355
        %v370 = vpack.c.b16 %v358, %v357
        %v371 = vpack.c.b16 %v360, %v359
        %v372 = vpack.c.b16 %v362, %v361
        %v373 = vpack.c.b16 %v364, %v363
        %v374 = vpack.c.b16 %v366, %v365
        %v380 = vunpack.c.l.b16 %v326
        %v381 = vunpack.c.l.b16 %v327
        %v382 = vunpack.c.l.b16 %v328
        %v383 = vunpack.c.l.b16 %v329
        %v384 = vunpack.c.l.b16 %v330
        %v385 = vpack.c.b16 %v381, %v380
        %v386 = vpack.c.b16 %v383, %v382
        %v387 = vpack.c.b16 %v384, %v384
        %vm390 = vcmask 293888
        %v392 = vsel %vm390, %v367, 0
        %v395 = vsel %vm390, %v368, 0
        %v398 = vsel %vm390, %v369, 0
        %v401 = vsel %vm390, %v370, 0
        %v404 = vsel %vm390, %v371, 0
        %v407 = vsel %vm390, %v372, 0
        %v410 = vsel %vm390, %v373, 0
        %v413 = vsel %vm390, %v374, 0
        %vm415 = vcmask 1041408
        %v417 = vsel %vm415, %v387, 0
        %419 = vmatpush.bf16.msra.mxu0 0
        %420 = vmatpush.bf16.msra.mxu0 0
        %421 = vmatpush.bf16.msra.mxu0 0
        %422 = vmatpush.bf16.msra.mxu0 0
        %423 = vmatpush.bf16.msra.mxu0 0
        %424 = vmatpush.bf16.msra.mxu0 %v417
        %425 = vmatpush.bf16.msra.mxu0 %v386
        %426 = vmatpush.bf16.msra.mxu0 %v385
        %427 = vmatmul.bf16.gmra.mxu0 %v392
        %v428 = vpop.f32.mrf.mxu0
        %v429 = vadd.f32 %v333, %v428
        %v430 = vpop.f32.mrf.mxu0
        %v431 = vadd.f32 %v333, %v430
        %432 = vmatmul.bf16.gmra.mxu0 %v395
        %v433 = vpop.f32.mrf.mxu0
        %v434 = vadd.f32 %v333, %v433
        %v435 = vpop.f32.mrf.mxu0
        %v436 = vadd.f32 %v333, %v435
        %437 = vmatmul.bf16.gmra.mxu0 %v398
        %v438 = vpop.f32.mrf.mxu0
        %v439 = vadd.f32 %v333, %v438
        %v440 = vpop.f32.mrf.mxu0
        %v441 = vadd.f32 %v333, %v440
        %442 = vmatmul.bf16.gmra.mxu0 %v401
        %v443 = vpop.f32.mrf.mxu0
        %v444 = vadd.f32 %v333, %v443
        %v445 = vpop.f32.mrf.mxu0
        %v446 = vadd.f32 %v333, %v445
        %447 = vmatmul.bf16.gmra.mxu0 %v404
        %v448 = vpop.f32.mrf.mxu0
        %v449 = vadd.f32 %v333, %v448
        %v450 = vpop.f32.mrf.mxu0
        %v451 = vadd.f32 %v333, %v450
        %452 = vmatmul.bf16.gmra.mxu0 %v407
        %v453 = vpop.f32.mrf.mxu0
        %v454 = vadd.f32 %v333, %v453
        %v455 = vpop.f32.mrf.mxu0
        %v456 = vadd.f32 %v333, %v455
        %457 = vmatmul.bf16.gmra.mxu0 %v410
        %v458 = vpop.f32.mrf.mxu0
        %v459 = vadd.f32 %v333, %v458
        %v460 = vpop.f32.mrf.mxu0
        %v461 = vadd.f32 %v333, %v460
        %462 = vmatmul.bf16.gmra.mxu0 %v413
        %v463 = vpop.f32.mrf.mxu0
        %v464 = vadd.f32 %v333, %v463
        %v465 = vpop.f32.mrf.mxu0
        %v466 = vadd.f32 %v333, %v465
        %467 = vdwg.mxu0
        %s468 = smul.u32 %s25, 128
        %s469 = scalar_lea.vmem %s291, %s468 [#allocation5]
        %vm470 = vcmask 261120
        %471 = vst.msk [vmem:[%s469] sm:$0xff] %vm470, %v429
        %472 = vst.msk [vmem:[%s469 + $0x8] sm:$0xff] %vm470, %v431
        %473 = vst.msk [vmem:[%s469 + $0x10] sm:$0xff] %vm470, %v434
        %474 = vst.msk [vmem:[%s469 + $0x18] sm:$0xff] %vm470, %v436
        %475 = vst.msk [vmem:[%s469 + $0x20] sm:$0xff] %vm470, %v439
        %476 = vst.msk [vmem:[%s469 + $0x28] sm:$0xff] %vm470, %v441
        %477 = vst.msk [vmem:[%s469 + $0x30] sm:$0xff] %vm470, %v444
        %478 = vst.msk [vmem:[%s469 + $0x38] sm:$0xff] %vm470, %v446
        %479 = vst.msk [vmem:[%s469 + $0x40] sm:$0xff] %vm470, %v449
        %480 = vst.msk [vmem:[%s469 + $0x48] sm:$0xff] %vm470, %v451
        %481 = vst.msk [vmem:[%s469 + $0x50] sm:$0xff] %vm470, %v454
        %482 = vst.msk [vmem:[%s469 + $0x58] sm:$0xff] %vm470, %v456
        %483 = vst.msk [vmem:[%s469 + $0x60] sm:$0xff] %vm470, %v459
        %484 = vst.msk [vmem:[%s469 + $0x68] sm:$0xff] %vm470, %v461
        %485 = vst.msk [vmem:[%s469 + $0x70] sm:$0xff] %vm470, %v464
        %486 = vst.msk [vmem:[%s469 + $0x78] sm:$0xff] %vm470, %v466
        %p487 = scmp.eq.s32.totalorder %s25, 0
        // Predicated region
        $region45: #{block_forward.1} parent=43 // pred_check
          %p488 = pneg %p487
        $region46: #{block_forward.1} parent=43 // pred_check_branch
          %490 = sbr.rel (%p488) target = $region48
        $region47: #{block_forward.1} parent=43 // pred_region
          %v491 = vsel %vm470, %v429, 0.0
          %v492 = vsel %vm470, %v431, 0.0
          %v493 = vadd.f32 %v491, %v492
          %v494 = vsel %vm470, %v434, 0.0
          %v495 = vadd.f32 %v493, %v494
          %v496 = vsel %vm470, %v436, 0.0
          %v497 = vadd.f32 %v495, %v496
          %v498 = vsel %vm470, %v439, 0.0
          %v499 = vadd.f32 %v497, %v498
          %v500 = vsel %vm470, %v441, 0.0
          %v501 = vadd.f32 %v499, %v500
          %v502 = vsel %vm470, %v444, 0.0
          %v503 = vadd.f32 %v501, %v502
          %v504 = vsel %vm470, %v446, 0.0
          %v505 = vadd.f32 %v503, %v504
          %v506 = vsel %vm470, %v449, 0.0
          %v507 = vadd.f32 %v505, %v506
          %v508 = vsel %vm470, %v451, 0.0
          %v509 = vadd.f32 %v507, %v508
          %v510 = vsel %vm470, %v454, 0.0
          %v511 = vadd.f32 %v509, %v510
          %v512 = vsel %vm470, %v456, 0.0
          %v513 = vadd.f32 %v511, %v512
          %v514 = vsel %vm470, %v459, 0.0
          %v515 = vadd.f32 %v513, %v514
          %v516 = vsel %vm470, %v461, 0.0
          %v517 = vadd.f32 %v515, %v516
          %v518 = vsel %vm470, %v464, 0.0
          %v519 = vadd.f32 %v517, %v518
          %v520 = vsel %vm470, %v466, 0.0
          %v521 = vadd.f32 %v519, %v520
          %v522 = vrot.slane %v521, 4
          %v523 = vadd.f32 %v521, %v522
          %v524 = vrot.slane %v523, 2
          %v525 = vadd.f32 %v523, %v524
          %v526 = vrot.slane %v525, 1
          %v527 = vadd.f32 %v525, %v526
          %v528 = vmul.f32 %v527, 0.0078125
          %v529 = vld [vmem:[%s3] sm:$0xff]
          %v530 = vld [vmem:[%s3 + $0x8] sm:$0xff]
          %v531 = vld [vmem:[%s3 + $0x10] sm:$0xff]
          %v532 = vld [vmem:[%s3 + $0x18] sm:$0xff]
          %v534 = vsel %vm470, %v528, 0
          %536 = vmatpush.msra.mxu0 0.0
          %537 = vmatpush.msra.mxu0 0.0
          %538 = vmatpush.msra.mxu0 0.0
          %539 = vmatpush.msra.mxu0 0.0
          %540 = vmatpush.msra.mxu0 0.0
          %541 = vmatpush.msra.mxu0 0.0
          %542 = vmatpush.msra.mxu0 0.0
          %543 = vmatpush.msra.mxu0 0.0
          %544 = vmatpush.msra.mxu0 0.0
          %545 = vmatpush.msra.mxu0 0.0
          %546 = vmatpush.msra.mxu0 0.0
          %547 = vmatpush.msra.mxu0 0.0
          %548 = vmatpush.msra.mxu0 %v532
          %549 = vmatpush.msra.mxu0 %v531
          %550 = vmatpush.msra.mxu0 %v530
          %551 = vmatpush.msra.mxu0 %v529
          %552 = vmatmul.f32.gmra.mxu0 %v534
          %v553 = vpop.f32.mrf.mxu0
          %v554 = vadd.f32 0.0, %v553
          %555 = vdwg.mxu0
          %v556 = vmul.f32 %v554, 0.25
          %vm557 = vcmask 253952
          %558 = vst.msk [vmem:[#allocation4] sm:$0x1] %vm557, %v556
          %559 = vst.msk [vmem:[#allocation2] sm:$0x1] %vm557, 0.0
          %560 = vst.msk [vmem:[#allocation3] sm:$0x1] %vm557, 0.0
        $region48: #{block_forward.1} parent=43 // pred_fallthru
          _
        %v561 = vld [vmem:[#allocation4] sm:$0x1]
        %v563 = vperm.slane %v561, 0
        %v565 = vsub.f32 %v429, %v563
        %v566 = vsub.f32 %v431, %v563
        %v567 = vsub.f32 %v434, %v563
        %v568 = vsub.f32 %v436, %v563
        %v569 = vsub.f32 %v439, %v563
        %v570 = vsub.f32 %v441, %v563
        %v571 = vsub.f32 %v444, %v563
        %v572 = vsub.f32 %v446, %v563
        %v573 = vsub.f32 %v449, %v563
        %v574 = vsub.f32 %v451, %v563
        %v575 = vsub.f32 %v454, %v563
        %v576 = vsub.f32 %v456, %v563
        %v577 = vsub.f32 %v459, %v563
        %v578 = vsub.f32 %v461, %v563
        %v579 = vsub.f32 %v464, %v563
        %v580 = vsub.f32 %v466, %v563
        %v581 = vld [vmem:[#allocation2] sm:$0x1]
        %v582 = vsel %vm470, %v565, 0.0
        %v583 = vsel %vm470, %v566, 0.0
        %v584 = vadd.f32 %v582, %v583
        %v585 = vsel %vm470, %v567, 0.0
        %v586 = vadd.f32 %v584, %v585
        %v587 = vsel %vm470, %v568, 0.0
        %v588 = vadd.f32 %v586, %v587
        %v589 = vsel %vm470, %v569, 0.0
        %v590 = vadd.f32 %v588, %v589
        %v591 = vsel %vm470, %v570, 0.0
        %v592 = vadd.f32 %v590, %v591
        %v593 = vsel %vm470, %v571, 0.0
        %v594 = vadd.f32 %v592, %v593
        %v595 = vsel %vm470, %v572, 0.0
        %v596 = vadd.f32 %v594, %v595
        %v597 = vsel %vm470, %v573, 0.0
        %v598 = vadd.f32 %v596, %v597
        %v599 = vsel %vm470, %v574, 0.0
        %v600 = vadd.f32 %v598, %v599
        %v601 = vsel %vm470, %v575, 0.0
        %v602 = vadd.f32 %v600, %v601
        %v603 = vsel %vm470, %v576, 0.0
        %v604 = vadd.f32 %v602, %v603
        %v605 = vsel %vm470, %v577, 0.0
        %v606 = vadd.f32 %v604, %v605
        %v607 = vsel %vm470, %v578, 0.0
        %v608 = vadd.f32 %v606, %v607
        %v609 = vsel %vm470, %v579, 0.0
        %v610 = vadd.f32 %v608, %v609
        %v611 = vsel %vm470, %v580, 0.0
        %v612 = vadd.f32 %v610, %v611
        %v613 = vrot.slane %v612, 4
        %v614 = vadd.f32 %v612, %v613
        %v615 = vrot.slane %v614, 2
        %v616 = vadd.f32 %v614, %v615
        %v617 = vrot.slane %v616, 1
        %v618 = vadd.f32 %v616, %v617
        %v619 = vadd.f32 %v581, %v618
        %vm620 = vcmask 253952
        %621 = vst.msk [vmem:[#allocation2] sm:$0x1] %vm620, %v619
        %v622 = vld [vmem:[#allocation3] sm:$0x1]
        %v623 = vmul.f32 %v565, %v565
        %v624 = vmul.f32 %v566, %v566
        %v625 = vmul.f32 %v567, %v567
        %v626 = vmul.f32 %v568, %v568
        %v627 = vmul.f32 %v569, %v569
        %v628 = vmul.f32 %v570, %v570
        %v629 = vmul.f32 %v571, %v571
        %v630 = vmul.f32 %v572, %v572
        %v631 = vmul.f32 %v573, %v573
        %v632 = vmul.f32 %v574, %v574
        %v633 = vmul.f32 %v575, %v575
        %v634 = vmul.f32 %v576, %v576
        %v635 = vmul.f32 %v577, %v577
        %v636 = vmul.f32 %v578, %v578
        %v637 = vmul.f32 %v579, %v579
        %v638 = vmul.f32 %v580, %v580
        %v639 = vsel %vm470, %v623, 0.0
        %v640 = vsel %vm470, %v624, 0.0
        %v641 = vadd.f32 %v639, %v640
        %v642 = vsel %vm470, %v625, 0.0
        %v643 = vadd.f32 %v641, %v642
        %v644 = vsel %vm470, %v626, 0.0
        %v645 = vadd.f32 %v643, %v644
        %v646 = vsel %vm470, %v627, 0.0
        %v647 = vadd.f32 %v645, %v646
        %v648 = vsel %vm470, %v628, 0.0
        %v649 = vadd.f32 %v647, %v648
        %v650 = vsel %vm470, %v629, 0.0
        %v651 = vadd.f32 %v649, %v650
        %v652 = vsel %vm470, %v630, 0.0
        %v653 = vadd.f32 %v651, %v652
        %v654 = vsel %vm470, %v631, 0.0
        %v655 = vadd.f32 %v653, %v654
        %v656 = vsel %vm470, %v632, 0.0
        %v657 = vadd.f32 %v655, %v656
        %v658 = vsel %vm470, %v633, 0.0
        %v659 = vadd.f32 %v657, %v658
        %v660 = vsel %vm470, %v634, 0.0
        %v661 = vadd.f32 %v659, %v660
        %v662 = vsel %vm470, %v635, 0.0
        %v663 = vadd.f32 %v661, %v662
        %v664 = vsel %vm470, %v636, 0.0
        %v665 = vadd.f32 %v663, %v664
        %v666 = vsel %vm470, %v637, 0.0
        %v667 = vadd.f32 %v665, %v666
        %v668 = vsel %vm470, %v638, 0.0
        %v669 = vadd.f32 %v667, %v668
        %v670 = vrot.slane %v669, 4
        %v671 = vadd.f32 %v669, %v670
        %v672 = vrot.slane %v671, 2
        %v673 = vadd.f32 %v671, %v672
        %v674 = vrot.slane %v673, 1
        %v675 = vadd.f32 %v673, %v674
        %v676 = vadd.f32 %v622, %v675
        %677 = vst.msk [vmem:[#allocation3] sm:$0x1] %vm620, %v676
        %p678 = scmp.eq.s32.totalorder %s25, 1
        // Predicated region
        $region49: #{block_forward.1} parent=43 // pred_check
          %p679 = pneg %p678
        $region50: #{block_forward.1} parent=43 // pred_check_branch
          %681 = sbr.rel (%p679) target = $region52
        $region51: #{block_forward.1} parent=43 // pred_region
          %v682 = vld [vmem:[#allocation2] sm:$0x1]
          %v683 = vld [vmem:[%s3] sm:$0xff]
          %v684 = vld [vmem:[%s3 + $0x8] sm:$0xff]
          %v685 = vld [vmem:[%s3 + $0x10] sm:$0xff]
          %v686 = vld [vmem:[%s3 + $0x18] sm:$0xff]
          %v688 = vsel %vm470, %v682, 0
          %690 = vmatpush.msra.mxu0 0.0
          %691 = vmatpush.msra.mxu0 0.0
          %692 = vmatpush.msra.mxu0 0.0
          %693 = vmatpush.msra.mxu0 0.0
          %694 = vmatpush.msra.mxu0 0.0
          %695 = vmatpush.msra.mxu0 0.0
          %696 = vmatpush.msra.mxu0 0.0
          %697 = vmatpush.msra.mxu0 0.0
          %698 = vmatpush.msra.mxu0 0.0
          %699 = vmatpush.msra.mxu0 0.0
          %700 = vmatpush.msra.mxu0 0.0
          %701 = vmatpush.msra.mxu0 0.0
          %702 = vmatpush.msra.mxu0 %v686
          %703 = vmatpush.msra.mxu0 %v685
          %704 = vmatpush.msra.mxu0 %v684
          %705 = vmatpush.msra.mxu0 %v683
          %706 = vmatmul.f32.gmra.mxu0 %v688
          %v707 = vpop.f32.mrf.mxu0
          %v708 = vadd.f32 0.0, %v707
          %709 = vdwg.mxu0
          %v710 = vld [vmem:[#allocation3] sm:$0x1]
          %v712 = vsel %vm470, %v710, 0
          %714 = vmatpush.msra.mxu0 0.0
          %715 = vmatpush.msra.mxu0 0.0
          %716 = vmatpush.msra.mxu0 0.0
          %717 = vmatpush.msra.mxu0 0.0
          %718 = vmatpush.msra.mxu0 0.0
          %719 = vmatpush.msra.mxu0 0.0
          %720 = vmatpush.msra.mxu0 0.0
          %721 = vmatpush.msra.mxu0 0.0
          %722 = vmatpush.msra.mxu0 0.0
          %723 = vmatpush.msra.mxu0 0.0
          %724 = vmatpush.msra.mxu0 0.0
          %725 = vmatpush.msra.mxu0 0.0
          %726 = vmatpush.msra.mxu0 %v686
          %727 = vmatpush.msra.mxu0 %v685
          %728 = vmatpush.msra.mxu0 %v684
          %729 = vmatpush.msra.mxu0 %v683
          %730 = vmatmul.f32.gmra.mxu0 %v712
          %v731 = vpop.f32.mrf.mxu0
          %v732 = vadd.f32 0.0, %v731
          %733 = vdwg.mxu0
          %v734 = vmul.f32 %v708, 0.0009765625
          %v735 = vmul.f32 %v732, 0.0009765625
          %v736 = vmul.f32 %v734, %v734
          %v737 = vsub.f32 %v735, %v736
          %v738 = vmax.f32 %v737, 0.0
          %v739 = vadd.f32 %v738, 1e-05
          %v740 = vrsqrt.pop %v739
          %v741 = vmul.f32 %v740, %v739
          %v742 = vmul.f32 %v741, %v740
          %v743 = vmul.f32 0.5, %v742
          %v744 = vsub.f32 1.5, %v743
          %v745 = vmul.f32 %v740, %v744
          %vm746 = vweird.f32 %v739
          %vm747 = vweird.f32 %v740
          %vm748 = vmor %vm746, %vm747
          %v749 = vsel %vm748, %v740, %v745
          %v750 = vld [vmem:[%s305] sm:$0x1]
          %v751 = vmul.f32 %v749, %v750
          %v752 = vld [vmem:[%s308] sm:$0x1]
          %v753 = vld [vmem:[#allocation4] sm:$0x1]
          %v754 = vadd.f32 %v734, %v753
          %v755 = vmul.f32 %v754, %v751
          %v756 = vsub.f32 %v752, %v755
          %v757 = vld [vmem:[%s291] sm:$0xff]
          %v758 = vld [vmem:[%s291 + $0x8] sm:$0xff]
          %v759 = vld [vmem:[%s291 + $0x10] sm:$0xff]
          %v760 = vld [vmem:[%s291 + $0x18] sm:$0xff]
          %v761 = vld [vmem:[%s291 + $0x20] sm:$0xff]
          %v762 = vld [vmem:[%s291 + $0x28] sm:$0xff]
          %v763 = vld [vmem:[%s291 + $0x30] sm:$0xff]
          %v764 = vld [vmem:[%s291 + $0x38] sm:$0xff]
          %v765 = vld [vmem:[%s291 + $0x40] sm:$0xff]
          %v766 = vld [vmem:[%s291 + $0x48] sm:$0xff]
          %v767 = vld [vmem:[%s291 + $0x50] sm:$0xff]
          %v768 = vld [vmem:[%s291 + $0x58] sm:$0xff]
          %v769 = vld [vmem:[%s291 + $0x60] sm:$0xff]
          %v770 = vld [vmem:[%s291 + $0x68] sm:$0xff]
          %v771 = vld [vmem:[%s291 + $0x70] sm:$0xff]
          %v772 = vld [vmem:[%s291 + $0x78] sm:$0xff]
          %v773 = vld [vmem:[%s291 + $0x80] sm:$0xff]
          %v774 = vld [vmem:[%s291 + $0x88] sm:$0xff]
          %v775 = vld [vmem:[%s291 + $0x90] sm:$0xff]
          %v776 = vld [vmem:[%s291 + $0x98] sm:$0xff]
          %v777 = vld [vmem:[%s291 + $0xa0] sm:$0xff]
          %v778 = vld [vmem:[%s291 + $0xa8] sm:$0xff]
          %v779 = vld [vmem:[%s291 + $0xb0] sm:$0xff]
          %v780 = vld [vmem:[%s291 + $0xb8] sm:$0xff]
          %v781 = vld [vmem:[%s291 + $0xc0] sm:$0xff]
          %v782 = vld [vmem:[%s291 + $0xc8] sm:$0xff]
          %v783 = vld [vmem:[%s291 + $0xd0] sm:$0xff]
          %v784 = vld [vmem:[%s291 + $0xd8] sm:$0xff]
          %v785 = vld [vmem:[%s291 + $0xe0] sm:$0xff]
          %v786 = vld [vmem:[%s291 + $0xe8] sm:$0xff]
          %v787 = vld [vmem:[%s291 + $0xf0] sm:$0xff]
          %v788 = vld [vmem:[%s291 + $0xf8] sm:$0xff]
          %v789 = vperm.slane %v751, 0
          %v790 = vmul.f32 %v757, %v789
          %v791 = vmul.f32 %v758, %v789
          %v792 = vmul.f32 %v759, %v789
          %v793 = vmul.f32 %v760, %v789
          %v794 = vmul.f32 %v761, %v789
          %v795 = vmul.f32 %v762, %v789
          %v796 = vmul.f32 %v763, %v789
          %v797 = vmul.f32 %v764, %v789
          %v798 = vmul.f32 %v765, %v789
          %v799 = vmul.f32 %v766, %v789
          %v800 = vmul.f32 %v767, %v789
          %v801 = vmul.f32 %v768, %v789
          %v802 = vmul.f32 %v769, %v789
          %v803 = vmul.f32 %v770, %v789
          %v804 = vmul.f32 %v771, %v789
          %v805 = vmul.f32 %v772, %v789
          %v806 = vmul.f32 %v773, %v789
          %v807 = vmul.f32 %v774, %v789
          %v808 = vmul.f32 %v775, %v789
          %v809 = vmul.f32 %v776, %v789
          %v810 = vmul.f32 %v777, %v789
          %v811 = vmul.f32 %v778, %v789
          %v812 = vmul.f32 %v779, %v789
          %v813 = vmul.f32 %v780, %v789
          %v814 = vmul.f32 %v781, %v789
          %v815 = vmul.f32 %v782, %v789
          %v816 = vmul.f32 %v783, %v789
          %v817 = vmul.f32 %v784, %v789
          %v818 = vmul.f32 %v785, %v789
          %v819 = vmul.f32 %v786, %v789
          %v820 = vmul.f32 %v787, %v789
          %v821 = vmul.f32 %v788, %v789
          %v823 = vperm.slane %v756, 0
          %v825 = vadd.f32 %v790, %v823
          %v826 = vadd.f32 %v791, %v823
          %v827 = vadd.f32 %v792, %v823
          %v828 = vadd.f32 %v793, %v823
          %v829 = vadd.f32 %v794, %v823
          %v830 = vadd.f32 %v795, %v823
          %v831 = vadd.f32 %v796, %v823
          %v832 = vadd.f32 %v797, %v823
          %v833 = vadd.f32 %v798, %v823
          %v834 = vadd.f32 %v799, %v823
          %v835 = vadd.f32 %v800, %v823
          %v836 = vadd.f32 %v801, %v823
          %v837 = vadd.f32 %v802, %v823
          %v838 = vadd.f32 %v803, %v823
          %v839 = vadd.f32 %v804, %v823
          %v840 = vadd.f32 %v805, %v823
          %v841 = vadd.f32 %v806, %v823
          %v842 = vadd.f32 %v807, %v823
          %v843 = vadd.f32 %v808, %v823
          %v844 = vadd.f32 %v809, %v823
          %v845 = vadd.f32 %v810, %v823
          %v846 = vadd.f32 %v811, %v823
          %v847 = vadd.f32 %v812, %v823
          %v848 = vadd.f32 %v813, %v823
          %v849 = vadd.f32 %v814, %v823
          %v850 = vadd.f32 %v815, %v823
          %v851 = vadd.f32 %v816, %v823
          %v852 = vadd.f32 %v817, %v823
          %v853 = vadd.f32 %v818, %v823
          %v854 = vadd.f32 %v819, %v823
          %v855 = vadd.f32 %v820, %v823
          %v856 = vadd.f32 %v821, %v823
          %v857 = vxor.u32 %v825, 2147483648
          %v858 = vxor.u32 %v826, 2147483648
          %v859 = vxor.u32 %v827, 2147483648
          %v860 = vxor.u32 %v828, 2147483648
          %v861 = vxor.u32 %v829, 2147483648
          %v862 = vxor.u32 %v830, 2147483648
          %v863 = vxor.u32 %v831, 2147483648
          %v864 = vxor.u32 %v832, 2147483648
          %v865 = vxor.u32 %v833, 2147483648
          %v866 = vxor.u32 %v834, 2147483648
          %v867 = vxor.u32 %v835, 2147483648
          %v868 = vxor.u32 %v836, 2147483648
          %v869 = vxor.u32 %v837, 2147483648
          %v870 = vxor.u32 %v838, 2147483648
          %v871 = vxor.u32 %v839, 2147483648
          %v872 = vxor.u32 %v840, 2147483648
          %v873 = vxor.u32 %v841, 2147483648
          %v874 = vxor.u32 %v842, 2147483648
          %v875 = vxor.u32 %v843, 2147483648
          %v876 = vxor.u32 %v844, 2147483648
          %v877 = vxor.u32 %v845, 2147483648
          %v878 = vxor.u32 %v846, 2147483648
          %v879 = vxor.u32 %v847, 2147483648
          %v880 = vxor.u32 %v848, 2147483648
          %v881 = vxor.u32 %v849, 2147483648
          %v882 = vxor.u32 %v850, 2147483648
          %v883 = vxor.u32 %v851, 2147483648
          %v884 = vxor.u32 %v852, 2147483648
          %v885 = vxor.u32 %v853, 2147483648
          %v886 = vxor.u32 %v854, 2147483648
          %v887 = vxor.u32 %v855, 2147483648
          %v888 = vxor.u32 %v856, 2147483648
          %v889 = vmul.f32 %v857, 1.442695
          %v890 = vpow.pop %v889
          %v891 = vmul.f32 %v858, 1.442695
          %v892 = vpow.pop %v891
          %v893 = vmul.f32 %v859, 1.442695
          %v894 = vpow.pop %v893
          %v895 = vmul.f32 %v860, 1.442695
          %v896 = vpow.pop %v895
          %v897 = vmul.f32 %v861, 1.442695
          %v898 = vpow.pop %v897
          %v899 = vmul.f32 %v862, 1.442695
          %v900 = vpow.pop %v899
          %v901 = vmul.f32 %v863, 1.442695
          %v902 = vpow.pop %v901
          %v903 = vmul.f32 %v864, 1.442695
          %v904 = vpow.pop %v903
          %v905 = vmul.f32 %v865, 1.442695
          %v906 = vpow.pop %v905
          %v907 = vmul.f32 %v866, 1.442695
          %v908 = vpow.pop %v907
          %v909 = vmul.f32 %v867, 1.442695
          %v910 = vpow.pop %v909
          %v911 = vmul.f32 %v868, 1.442695
          %v912 = vpow.pop %v911
          %v913 = vmul.f32 %v869, 1.442695
          %v914 = vpow.pop %v913
          %v915 = vmul.f32 %v870, 1.442695
          %v916 = vpow.pop %v915
          %v917 = vmul.f32 %v871, 1.442695
          %v918 = vpow.pop %v917
          %v919 = vmul.f32 %v872, 1.442695
          %v920 = vpow.pop %v919
          %v921 = vmul.f32 %v873, 1.442695
          %v922 = vpow.pop %v921
          %v923 = vmul.f32 %v874, 1.442695
          %v924 = vpow.pop %v923
          %v925 = vmul.f32 %v875, 1.442695
          %v926 = vpow.pop %v925
          %v927 = vmul.f32 %v876, 1.442695
          %v928 = vpow.pop %v927
          %v929 = vmul.f32 %v877, 1.442695
          %v930 = vpow.pop %v929
          %v931 = vmul.f32 %v878, 1.442695
          %v932 = vpow.pop %v931
          %v933 = vmul.f32 %v879, 1.442695
          %v934 = vpow.pop %v933
          %v935 = vmul.f32 %v880, 1.442695
          %v936 = vpow.pop %v935
          %v937 = vmul.f32 %v881, 1.442695
          %v938 = vpow.pop %v937
          %v939 = vmul.f32 %v882, 1.442695
          %v940 = vpow.pop %v939
          %v941 = vmul.f32 %v883, 1.442695
          %v942 = vpow.pop %v941
          %v943 = vmul.f32 %v884, 1.442695
          %v944 = vpow.pop %v943
          %v945 = vmul.f32 %v885, 1.442695
          %v946 = vpow.pop %v945
          %v947 = vmul.f32 %v886, 1.442695
          %v948 = vpow.pop %v947
          %v949 = vmul.f32 %v887, 1.442695
          %v950 = vpow.pop %v949
          %v951 = vmul.f32 %v888, 1.442695
          %v952 = vpow.pop %v951
          %v953 = vadd.f32 %v890, 1.0
          %v954 = vadd.f32 %v892, 1.0
          %v955 = vadd.f32 %v894, 1.0
          %v956 = vadd.f32 %v896, 1.0
          %v957 = vadd.f32 %v898, 1.0
          %v958 = vadd.f32 %v900, 1.0
          %v959 = vadd.f32 %v902, 1.0
          %v960 = vadd.f32 %v904, 1.0
          %v961 = vadd.f32 %v906, 1.0
          %v962 = vadd.f32 %v908, 1.0
          %v963 = vadd.f32 %v910, 1.0
          %v964 = vadd.f32 %v912, 1.0
          %v965 = vadd.f32 %v914, 1.0
          %v966 = vadd.f32 %v916, 1.0
          %v967 = vadd.f32 %v918, 1.0
          %v968 = vadd.f32 %v920, 1.0
          %v969 = vadd.f32 %v922, 1.0
          %v970 = vadd.f32 %v924, 1.0
          %v971 = vadd.f32 %v926, 1.0
          %v972 = vadd.f32 %v928, 1.0
          %v973 = vadd.f32 %v930, 1.0
          %v974 = vadd.f32 %v932, 1.0
          %v975 = vadd.f32 %v934, 1.0
          %v976 = vadd.f32 %v936, 1.0
          %v977 = vadd.f32 %v938, 1.0
          %v978 = vadd.f32 %v940, 1.0
          %v979 = vadd.f32 %v942, 1.0
          %v980 = vadd.f32 %v944, 1.0
          %v981 = vadd.f32 %v946, 1.0
          %v982 = vadd.f32 %v948, 1.0
          %v983 = vadd.f32 %v950, 1.0
          %v984 = vadd.f32 %v952, 1.0
          %v985 = vrcp.pop %v953
          %v986 = vmul.f32 %v953, %v985
          %v987 = vsub.f32 1.0, %v986
          %v988 = vmul.f32 %v985, %v987
          %v989 = vadd.f32 %v985, %v988
          %vm990 = vweird.f32 %v953
          %vm991 = vweird.f32 %v985
          %vm992 = vmor %vm990, %vm991
          %v993 = vsel %vm992, %v985, %v989
          %v994 = vand.u32 2147483647, %v953
          %vm995 = vcmp.eq.f32.partialorder %v994, 8.507059e+37
          %v996 = vand.u32 %v953, 2147483648
          %v997 = vor.u32 1.1754944e-38, %v996
          %v998 = vsel %vm995, %v997, %v993
          %v999 = vmul.f32 1.0, %v998
          %v1000 = vrcp.pop %v954
          %v1001 = vmul.f32 %v954, %v1000
          %v1002 = vsub.f32 1.0, %v1001
          %v1003 = vmul.f32 %v1000, %v1002
          %v1004 = vadd.f32 %v1000, %v1003
          %vm1005 = vweird.f32 %v954
          %vm1006 = vweird.f32 %v1000
          %vm1007 = vmor %vm1005, %vm1006
          %v1008 = vsel %vm1007, %v1000, %v1004
          %v1009 = vand.u32 2147483647, %v954
          %vm1010 = vcmp.eq.f32.partialorder %v1009, 8.507059e+37
          %v1011 = vand.u32 %v954, 2147483648
          %v1012 = vor.u32 1.1754944e-38, %v1011
          %v1013 = vsel %vm1010, %v1012, %v1008
          %v1014 = vmul.f32 1.0, %v1013
          %v1015 = vrcp.pop %v955
          %v1016 = vmul.f32 %v955, %v1015
          %v1017 = vsub.f32 1.0, %v1016
          %v1018 = vmul.f32 %v1015, %v1017
          %v1019 = vadd.f32 %v1015, %v1018
          %vm1020 = vweird.f32 %v955
          %vm1021 = vweird.f32 %v1015
          %vm1022 = vmor %vm1020, %vm1021
          %v1023 = vsel %vm1022, %v1015, %v1019
          %v1024 = vand.u32 2147483647, %v955
          %vm1025 = vcmp.eq.f32.partialorder %v1024, 8.507059e+37
          %v1026 = vand.u32 %v955, 2147483648
          %v1027 = vor.u32 1.1754944e-38, %v1026
          %v1028 = vsel %vm1025, %v1027, %v1023
          %v1029 = vmul.f32 1.0, %v1028
          %v1030 = vrcp.pop %v956
          %v1031 = vmul.f32 %v956, %v1030
          %v1032 = vsub.f32 1.0, %v1031
          %v1033 = vmul.f32 %v1030, %v1032
          %v1034 = vadd.f32 %v1030, %v1033
          %vm1035 = vweird.f32 %v956
          %vm1036 = vweird.f32 %v1030
          %vm1037 = vmor %vm1035, %vm1036
          %v1038 = vsel %vm1037, %v1030, %v1034
          %v1039 = vand.u32 2147483647, %v956
          %vm1040 = vcmp.eq.f32.partialorder %v1039, 8.507059e+37
          %v1041 = vand.u32 %v956, 2147483648
          %v1042 = vor.u32 1.1754944e-38, %v1041
          %v1043 = vsel %vm1040, %v1042, %v1038
          %v1044 = vmul.f32 1.0, %v1043
          %v1045 = vrcp.pop %v957
          %v1046 = vmul.f32 %v957, %v1045
          %v1047 = vsub.f32 1.0, %v1046
          %v1048 = vmul.f32 %v1045, %v1047
          %v1049 = vadd.f32 %v1045, %v1048
          %vm1050 = vweird.f32 %v957
          %vm1051 = vweird.f32 %v1045
          %vm1052 = vmor %vm1050, %vm1051
          %v1053 = vsel %vm1052, %v1045, %v1049
          %v1054 = vand.u32 2147483647, %v957
          %vm1055 = vcmp.eq.f32.partialorder %v1054, 8.507059e+37
          %v1056 = vand.u32 %v957, 2147483648
          %v1057 = vor.u32 1.1754944e-38, %v1056
          %v1058 = vsel %vm1055, %v1057, %v1053
          %v1059 = vmul.f32 1.0, %v1058
          %v1060 = vrcp.pop %v958
          %v1061 = vmul.f32 %v958, %v1060
          %v1062 = vsub.f32 1.0, %v1061
          %v1063 = vmul.f32 %v1060, %v1062
          %v1064 = vadd.f32 %v1060, %v1063
          %vm1065 = vweird.f32 %v958
          %vm1066 = vweird.f32 %v1060
          %vm1067 = vmor %vm1065, %vm1066
          %v1068 = vsel %vm1067, %v1060, %v1064
          %v1069 = vand.u32 2147483647, %v958
          %vm1070 = vcmp.eq.f32.partialorder %v1069, 8.507059e+37
          %v1071 = vand.u32 %v958, 2147483648
          %v1072 = vor.u32 1.1754944e-38, %v1071
          %v1073 = vsel %vm1070, %v1072, %v1068
          %v1074 = vmul.f32 1.0, %v1073
          %v1075 = vrcp.pop %v959
          %v1076 = vmul.f32 %v959, %v1075
          %v1077 = vsub.f32 1.0, %v1076
          %v1078 = vmul.f32 %v1075, %v1077
          %v1079 = vadd.f32 %v1075, %v1078
          %vm1080 = vweird.f32 %v959
          %vm1081 = vweird.f32 %v1075
          %vm1082 = vmor %vm1080, %vm1081
          %v1083 = vsel %vm1082, %v1075, %v1079
          %v1084 = vand.u32 2147483647, %v959
          %vm1085 = vcmp.eq.f32.partialorder %v1084, 8.507059e+37
          %v1086 = vand.u32 %v959, 2147483648
          %v1087 = vor.u32 1.1754944e-38, %v1086
          %v1088 = vsel %vm1085, %v1087, %v1083
          %v1089 = vmul.f32 1.0, %v1088
          %v1090 = vrcp.pop %v960
          %v1091 = vmul.f32 %v960, %v1090
          %v1092 = vsub.f32 1.0, %v1091
          %v1093 = vmul.f32 %v1090, %v1092
          %v1094 = vadd.f32 %v1090, %v1093
          %vm1095 = vweird.f32 %v960
          %vm1096 = vweird.f32 %v1090
          %vm1097 = vmor %vm1095, %vm1096
          %v1098 = vsel %vm1097, %v1090, %v1094
          %v1099 = vand.u32 2147483647, %v960
          %vm1100 = vcmp.eq.f32.partialorder %v1099, 8.507059e+37
          %v1101 = vand.u32 %v960, 2147483648
          %v1102 = vor.u32 1.1754944e-38, %v1101
          %v1103 = vsel %vm1100, %v1102, %v1098
          %v1104 = vmul.f32 1.0, %v1103
          %v1105 = vrcp.pop %v961
          %v1106 = vmul.f32 %v961, %v1105
          %v1107 = vsub.f32 1.0, %v1106
          %v1108 = vmul.f32 %v1105, %v1107
          %v1109 = vadd.f32 %v1105, %v1108
          %vm1110 = vweird.f32 %v961
          %vm1111 = vweird.f32 %v1105
          %vm1112 = vmor %vm1110, %vm1111
          %v1113 = vsel %vm1112, %v1105, %v1109
          %v1114 = vand.u32 2147483647, %v961
          %vm1115 = vcmp.eq.f32.partialorder %v1114, 8.507059e+37
          %v1116 = vand.u32 %v961, 2147483648
          %v1117 = vor.u32 1.1754944e-38, %v1116
          %v1118 = vsel %vm1115, %v1117, %v1113
          %v1119 = vmul.f32 1.0, %v1118
          %v1120 = vrcp.pop %v962
          %v1121 = vmul.f32 %v962, %v1120
          %v1122 = vsub.f32 1.0, %v1121
          %v1123 = vmul.f32 %v1120, %v1122
          %v1124 = vadd.f32 %v1120, %v1123
          %vm1125 = vweird.f32 %v962
          %vm1126 = vweird.f32 %v1120
          %vm1127 = vmor %vm1125, %vm1126
          %v1128 = vsel %vm1127, %v1120, %v1124
          %v1129 = vand.u32 2147483647, %v962
          %vm1130 = vcmp.eq.f32.partialorder %v1129, 8.507059e+37
          %v1131 = vand.u32 %v962, 2147483648
          %v1132 = vor.u32 1.1754944e-38, %v1131
          %v1133 = vsel %vm1130, %v1132, %v1128
          %v1134 = vmul.f32 1.0, %v1133
          %v1135 = vrcp.pop %v963
          %v1136 = vmul.f32 %v963, %v1135
          %v1137 = vsub.f32 1.0, %v1136
          %v1138 = vmul.f32 %v1135, %v1137
          %v1139 = vadd.f32 %v1135, %v1138
          %vm1140 = vweird.f32 %v963
          %vm1141 = vweird.f32 %v1135
          %vm1142 = vmor %vm1140, %vm1141
          %v1143 = vsel %vm1142, %v1135, %v1139
          %v1144 = vand.u32 2147483647, %v963
          %vm1145 = vcmp.eq.f32.partialorder %v1144, 8.507059e+37
          %v1146 = vand.u32 %v963, 2147483648
          %v1147 = vor.u32 1.1754944e-38, %v1146
          %v1148 = vsel %vm1145, %v1147, %v1143
          %v1149 = vmul.f32 1.0, %v1148
          %v1150 = vrcp.pop %v964
          %v1151 = vmul.f32 %v964, %v1150
          %v1152 = vsub.f32 1.0, %v1151
          %v1153 = vmul.f32 %v1150, %v1152
          %v1154 = vadd.f32 %v1150, %v1153
          %vm1155 = vweird.f32 %v964
          %vm1156 = vweird.f32 %v1150
          %vm1157 = vmor %vm1155, %vm1156
          %v1158 = vsel %vm1157, %v1150, %v1154
          %v1159 = vand.u32 2147483647, %v964
          %vm1160 = vcmp.eq.f32.partialorder %v1159, 8.507059e+37
          %v1161 = vand.u32 %v964, 2147483648
          %v1162 = vor.u32 1.1754944e-38, %v1161
          %v1163 = vsel %vm1160, %v1162, %v1158
          %v1164 = vmul.f32 1.0, %v1163
          %v1165 = vrcp.pop %v965
          %v1166 = vmul.f32 %v965, %v1165
          %v1167 = vsub.f32 1.0, %v1166
          %v1168 = vmul.f32 %v1165, %v1167
          %v1169 = vadd.f32 %v1165, %v1168
          %vm1170 = vweird.f32 %v965
          %vm1171 = vweird.f32 %v1165
          %vm1172 = vmor %vm1170, %vm1171
          %v1173 = vsel %vm1172, %v1165, %v1169
          %v1174 = vand.u32 2147483647, %v965
          %vm1175 = vcmp.eq.f32.partialorder %v1174, 8.507059e+37
          %v1176 = vand.u32 %v965, 2147483648
          %v1177 = vor.u32 1.1754944e-38, %v1176
          %v1178 = vsel %vm1175, %v1177, %v1173
          %v1179 = vmul.f32 1.0, %v1178
          %v1180 = vrcp.pop %v966
          %v1181 = vmul.f32 %v966, %v1180
          %v1182 = vsub.f32 1.0, %v1181
          %v1183 = vmul.f32 %v1180, %v1182
          %v1184 = vadd.f32 %v1180, %v1183
          %vm1185 = vweird.f32 %v966
          %vm1186 = vweird.f32 %v1180
          %vm1187 = vmor %vm1185, %vm1186
          %v1188 = vsel %vm1187, %v1180, %v1184
          %v1189 = vand.u32 2147483647, %v966
          %vm1190 = vcmp.eq.f32.partialorder %v1189, 8.507059e+37
          %v1191 = vand.u32 %v966, 2147483648
          %v1192 = vor.u32 1.1754944e-38, %v1191
          %v1193 = vsel %vm1190, %v1192, %v1188
          %v1194 = vmul.f32 1.0, %v1193
          %v1195 = vrcp.pop %v967
          %v1196 = vmul.f32 %v967, %v1195
          %v1197 = vsub.f32 1.0, %v1196
          %v1198 = vmul.f32 %v1195, %v1197
          %v1199 = vadd.f32 %v1195, %v1198
          %vm1200 = vweird.f32 %v967
          %vm1201 = vweird.f32 %v1195
          %vm1202 = vmor %vm1200, %vm1201
          %v1203 = vsel %vm1202, %v1195, %v1199
          %v1204 = vand.u32 2147483647, %v967
          %vm1205 = vcmp.eq.f32.partialorder %v1204, 8.507059e+37
          %v1206 = vand.u32 %v967, 2147483648
          %v1207 = vor.u32 1.1754944e-38, %v1206
          %v1208 = vsel %vm1205, %v1207, %v1203
          %v1209 = vmul.f32 1.0, %v1208
          %v1210 = vrcp.pop %v968
          %v1211 = vmul.f32 %v968, %v1210
          %v1212 = vsub.f32 1.0, %v1211
          %v1213 = vmul.f32 %v1210, %v1212
          %v1214 = vadd.f32 %v1210, %v1213
          %vm1215 = vweird.f32 %v968
          %vm1216 = vweird.f32 %v1210
          %vm1217 = vmor %vm1215, %vm1216
          %v1218 = vsel %vm1217, %v1210, %v1214
          %v1219 = vand.u32 2147483647, %v968
          %vm1220 = vcmp.eq.f32.partialorder %v1219, 8.507059e+37
          %v1221 = vand.u32 %v968, 2147483648
          %v1222 = vor.u32 1.1754944e-38, %v1221
          %v1223 = vsel %vm1220, %v1222, %v1218
          %v1224 = vmul.f32 1.0, %v1223
          %v1225 = vrcp.pop %v969
          %v1226 = vmul.f32 %v969, %v1225
          %v1227 = vsub.f32 1.0, %v1226
          %v1228 = vmul.f32 %v1225, %v1227
          %v1229 = vadd.f32 %v1225, %v1228
          %vm1230 = vweird.f32 %v969
          %vm1231 = vweird.f32 %v1225
          %vm1232 = vmor %vm1230, %vm1231
          %v1233 = vsel %vm1232, %v1225, %v1229
          %v1234 = vand.u32 2147483647, %v969
          %vm1235 = vcmp.eq.f32.partialorder %v1234, 8.507059e+37
          %v1236 = vand.u32 %v969, 2147483648
          %v1237 = vor.u32 1.1754944e-38, %v1236
          %v1238 = vsel %vm1235, %v1237, %v1233
          %v1239 = vmul.f32 1.0, %v1238
          %v1240 = vrcp.pop %v970
          %v1241 = vmul.f32 %v970, %v1240
          %v1242 = vsub.f32 1.0, %v1241
          %v1243 = vmul.f32 %v1240, %v1242
          %v1244 = vadd.f32 %v1240, %v1243
          %vm1245 = vweird.f32 %v970
          %vm1246 = vweird.f32 %v1240
          %vm1247 = vmor %vm1245, %vm1246
          %v1248 = vsel %vm1247, %v1240, %v1244
          %v1249 = vand.u32 2147483647, %v970
          %vm1250 = vcmp.eq.f32.partialorder %v1249, 8.507059e+37
          %v1251 = vand.u32 %v970, 2147483648
          %v1252 = vor.u32 1.1754944e-38, %v1251
          %v1253 = vsel %vm1250, %v1252, %v1248
          %v1254 = vmul.f32 1.0, %v1253
          %v1255 = vrcp.pop %v971
          %v1256 = vmul.f32 %v971, %v1255
          %v1257 = vsub.f32 1.0, %v1256
          %v1258 = vmul.f32 %v1255, %v1257
          %v1259 = vadd.f32 %v1255, %v1258
          %vm1260 = vweird.f32 %v971
          %vm1261 = vweird.f32 %v1255
          %vm1262 = vmor %vm1260, %vm1261
          %v1263 = vsel %vm1262, %v1255, %v1259
          %v1264 = vand.u32 2147483647, %v971
          %vm1265 = vcmp.eq.f32.partialorder %v1264, 8.507059e+37
          %v1266 = vand.u32 %v971, 2147483648
          %v1267 = vor.u32 1.1754944e-38, %v1266
          %v1268 = vsel %vm1265, %v1267, %v1263
          %v1269 = vmul.f32 1.0, %v1268
          %v1270 = vrcp.pop %v972
          %v1271 = vmul.f32 %v972, %v1270
          %v1272 = vsub.f32 1.0, %v1271
          %v1273 = vmul.f32 %v1270, %v1272
          %v1274 = vadd.f32 %v1270, %v1273
          %vm1275 = vweird.f32 %v972
          %vm1276 = vweird.f32 %v1270
          %vm1277 = vmor %vm1275, %vm1276
          %v1278 = vsel %vm1277, %v1270, %v1274
          %v1279 = vand.u32 2147483647, %v972
          %vm1280 = vcmp.eq.f32.partialorder %v1279, 8.507059e+37
          %v1281 = vand.u32 %v972, 2147483648
          %v1282 = vor.u32 1.1754944e-38, %v1281
          %v1283 = vsel %vm1280, %v1282, %v1278
          %v1284 = vmul.f32 1.0, %v1283
          %v1285 = vrcp.pop %v973
          %v1286 = vmul.f32 %v973, %v1285
          %v1287 = vsub.f32 1.0, %v1286
          %v1288 = vmul.f32 %v1285, %v1287
          %v1289 = vadd.f32 %v1285, %v1288
          %vm1290 = vweird.f32 %v973
          %vm1291 = vweird.f32 %v1285
          %vm1292 = vmor %vm1290, %vm1291
          %v1293 = vsel %vm1292, %v1285, %v1289
          %v1294 = vand.u32 2147483647, %v973
          %vm1295 = vcmp.eq.f32.partialorder %v1294, 8.507059e+37
          %v1296 = vand.u32 %v973, 2147483648
          %v1297 = vor.u32 1.1754944e-38, %v1296
          %v1298 = vsel %vm1295, %v1297, %v1293
          %v1299 = vmul.f32 1.0, %v1298
          %v1300 = vrcp.pop %v974
          %v1301 = vmul.f32 %v974, %v1300
          %v1302 = vsub.f32 1.0, %v1301
          %v1303 = vmul.f32 %v1300, %v1302
          %v1304 = vadd.f32 %v1300, %v1303
          %vm1305 = vweird.f32 %v974
          %vm1306 = vweird.f32 %v1300
          %vm1307 = vmor %vm1305, %vm1306
          %v1308 = vsel %vm1307, %v1300, %v1304
          %v1309 = vand.u32 2147483647, %v974
          %vm1310 = vcmp.eq.f32.partialorder %v1309, 8.507059e+37
          %v1311 = vand.u32 %v974, 2147483648
          %v1312 = vor.u32 1.1754944e-38, %v1311
          %v1313 = vsel %vm1310, %v1312, %v1308
          %v1314 = vmul.f32 1.0, %v1313
          %v1315 = vrcp.pop %v975
          %v1316 = vmul.f32 %v975, %v1315
          %v1317 = vsub.f32 1.0, %v1316
          %v1318 = vmul.f32 %v1315, %v1317
          %v1319 = vadd.f32 %v1315, %v1318
          %vm1320 = vweird.f32 %v975
          %vm1321 = vweird.f32 %v1315
          %vm1322 = vmor %vm1320, %vm1321
          %v1323 = vsel %vm1322, %v1315, %v1319
          %v1324 = vand.u32 2147483647, %v975
          %vm1325 = vcmp.eq.f32.partialorder %v1324, 8.507059e+37
          %v1326 = vand.u32 %v975, 2147483648
          %v1327 = vor.u32 1.1754944e-38, %v1326
          %v1328 = vsel %vm1325, %v1327, %v1323
          %v1329 = vmul.f32 1.0, %v1328
          %v1330 = vrcp.pop %v976
          %v1331 = vmul.f32 %v976, %v1330
          %v1332 = vsub.f32 1.0, %v1331
          %v1333 = vmul.f32 %v1330, %v1332
          %v1334 = vadd.f32 %v1330, %v1333
          %vm1335 = vweird.f32 %v976
          %vm1336 = vweird.f32 %v1330
          %vm1337 = vmor %vm1335, %vm1336
          %v1338 = vsel %vm1337, %v1330, %v1334
          %v1339 = vand.u32 2147483647, %v976
          %vm1340 = vcmp.eq.f32.partialorder %v1339, 8.507059e+37
          %v1341 = vand.u32 %v976, 2147483648
          %v1342 = vor.u32 1.1754944e-38, %v1341
          %v1343 = vsel %vm1340, %v1342, %v1338
          %v1344 = vmul.f32 1.0, %v1343
          %v1345 = vrcp.pop %v977
          %v1346 = vmul.f32 %v977, %v1345
          %v1347 = vsub.f32 1.0, %v1346
          %v1348 = vmul.f32 %v1345, %v1347
          %v1349 = vadd.f32 %v1345, %v1348
          %vm1350 = vweird.f32 %v977
          %vm1351 = vweird.f32 %v1345
          %vm1352 = vmor %vm1350, %vm1351
          %v1353 = vsel %vm1352, %v1345, %v1349
          %v1354 = vand.u32 2147483647, %v977
          %vm1355 = vcmp.eq.f32.partialorder %v1354, 8.507059e+37
          %v1356 = vand.u32 %v977, 2147483648
          %v1357 = vor.u32 1.1754944e-38, %v1356
          %v1358 = vsel %vm1355, %v1357, %v1353
          %v1359 = vmul.f32 1.0, %v1358
          %v1360 = vrcp.pop %v978
          %v1361 = vmul.f32 %v978, %v1360
          %v1362 = vsub.f32 1.0, %v1361
          %v1363 = vmul.f32 %v1360, %v1362
          %v1364 = vadd.f32 %v1360, %v1363
          %vm1365 = vweird.f32 %v978
          %vm1366 = vweird.f32 %v1360
          %vm1367 = vmor %vm1365, %vm1366
          %v1368 = vsel %vm1367, %v1360, %v1364
          %v1369 = vand.u32 2147483647, %v978
          %vm1370 = vcmp.eq.f32.partialorder %v1369, 8.507059e+37
          %v1371 = vand.u32 %v978, 2147483648
          %v1372 = vor.u32 1.1754944e-38, %v1371
          %v1373 = vsel %vm1370, %v1372, %v1368
          %v1374 = vmul.f32 1.0, %v1373
          %v1375 = vrcp.pop %v979
          %v1376 = vmul.f32 %v979, %v1375
          %v1377 = vsub.f32 1.0, %v1376
          %v1378 = vmul.f32 %v1375, %v1377
          %v1379 = vadd.f32 %v1375, %v1378
          %vm1380 = vweird.f32 %v979
          %vm1381 = vweird.f32 %v1375
          %vm1382 = vmor %vm1380, %vm1381
          %v1383 = vsel %vm1382, %v1375, %v1379
          %v1384 = vand.u32 2147483647, %v979
          %vm1385 = vcmp.eq.f32.partialorder %v1384, 8.507059e+37
          %v1386 = vand.u32 %v979, 2147483648
          %v1387 = vor.u32 1.1754944e-38, %v1386
          %v1388 = vsel %vm1385, %v1387, %v1383
          %v1389 = vmul.f32 1.0, %v1388
          %v1390 = vrcp.pop %v980
          %v1391 = vmul.f32 %v980, %v1390
          %v1392 = vsub.f32 1.0, %v1391
          %v1393 = vmul.f32 %v1390, %v1392
          %v1394 = vadd.f32 %v1390, %v1393
          %vm1395 = vweird.f32 %v980
          %vm1396 = vweird.f32 %v1390
          %vm1397 = vmor %vm1395, %vm1396
          %v1398 = vsel %vm1397, %v1390, %v1394
          %v1399 = vand.u32 2147483647, %v980
          %vm1400 = vcmp.eq.f32.partialorder %v1399, 8.507059e+37
          %v1401 = vand.u32 %v980, 2147483648
          %v1402 = vor.u32 1.1754944e-38, %v1401
          %v1403 = vsel %vm1400, %v1402, %v1398
          %v1404 = vmul.f32 1.0, %v1403
          %v1405 = vrcp.pop %v981
          %v1406 = vmul.f32 %v981, %v1405
          %v1407 = vsub.f32 1.0, %v1406
          %v1408 = vmul.f32 %v1405, %v1407
          %v1409 = vadd.f32 %v1405, %v1408
          %vm1410 = vweird.f32 %v981
          %vm1411 = vweird.f32 %v1405
          %vm1412 = vmor %vm1410, %vm1411
          %v1413 = vsel %vm1412, %v1405, %v1409
          %v1414 = vand.u32 2147483647, %v981
          %vm1415 = vcmp.eq.f32.partialorder %v1414, 8.507059e+37
          %v1416 = vand.u32 %v981, 2147483648
          %v1417 = vor.u32 1.1754944e-38, %v1416
          %v1418 = vsel %vm1415, %v1417, %v1413
          %v1419 = vmul.f32 1.0, %v1418
          %v1420 = vrcp.pop %v982
          %v1421 = vmul.f32 %v982, %v1420
          %v1422 = vsub.f32 1.0, %v1421
          %v1423 = vmul.f32 %v1420, %v1422
          %v1424 = vadd.f32 %v1420, %v1423
          %vm1425 = vweird.f32 %v982
          %vm1426 = vweird.f32 %v1420
          %vm1427 = vmor %vm1425, %vm1426
          %v1428 = vsel %vm1427, %v1420, %v1424
          %v1429 = vand.u32 2147483647, %v982
          %vm1430 = vcmp.eq.f32.partialorder %v1429, 8.507059e+37
          %v1431 = vand.u32 %v982, 2147483648
          %v1432 = vor.u32 1.1754944e-38, %v1431
          %v1433 = vsel %vm1430, %v1432, %v1428
          %v1434 = vmul.f32 1.0, %v1433
          %v1435 = vrcp.pop %v983
          %v1436 = vmul.f32 %v983, %v1435
          %v1437 = vsub.f32 1.0, %v1436
          %v1438 = vmul.f32 %v1435, %v1437
          %v1439 = vadd.f32 %v1435, %v1438
          %vm1440 = vweird.f32 %v983
          %vm1441 = vweird.f32 %v1435
          %vm1442 = vmor %vm1440, %vm1441
          %v1443 = vsel %vm1442, %v1435, %v1439
          %v1444 = vand.u32 2147483647, %v983
          %vm1445 = vcmp.eq.f32.partialorder %v1444, 8.507059e+37
          %v1446 = vand.u32 %v983, 2147483648
          %v1447 = vor.u32 1.1754944e-38, %v1446
          %v1448 = vsel %vm1445, %v1447, %v1443
          %v1449 = vmul.f32 1.0, %v1448
          %v1450 = vrcp.pop %v984
          %v1451 = vmul.f32 %v984, %v1450
          %v1452 = vsub.f32 1.0, %v1451
          %v1453 = vmul.f32 %v1450, %v1452
          %v1454 = vadd.f32 %v1450, %v1453
          %vm1455 = vweird.f32 %v984
          %vm1456 = vweird.f32 %v1450
          %vm1457 = vmor %vm1455, %vm1456
          %v1458 = vsel %vm1457, %v1450, %v1454
          %v1459 = vand.u32 2147483647, %v984
          %vm1460 = vcmp.eq.f32.partialorder %v1459, 8.507059e+37
          %v1461 = vand.u32 %v984, 2147483648
          %v1462 = vor.u32 1.1754944e-38, %v1461
          %v1463 = vsel %vm1460, %v1462, %v1458
          %v1464 = vmul.f32 1.0, %v1463
          %v1465 = vmul.f32 %v825, %v999
          %v1466 = vmul.f32 %v826, %v1014
          %v1467 = vmul.f32 %v827, %v1029
          %v1468 = vmul.f32 %v828, %v1044
          %v1469 = vmul.f32 %v829, %v1059
          %v1470 = vmul.f32 %v830, %v1074
          %v1471 = vmul.f32 %v831, %v1089
          %v1472 = vmul.f32 %v832, %v1104
          %v1473 = vmul.f32 %v833, %v1119
          %v1474 = vmul.f32 %v834, %v1134
          %v1475 = vmul.f32 %v835, %v1149
          %v1476 = vmul.f32 %v836, %v1164
          %v1477 = vmul.f32 %v837, %v1179
          %v1478 = vmul.f32 %v838, %v1194
          %v1479 = vmul.f32 %v839, %v1209
          %v1480 = vmul.f32 %v840, %v1224
          %v1481 = vmul.f32 %v841, %v1239
          %v1482 = vmul.f32 %v842, %v1254
          %v1483 = vmul.f32 %v843, %v1269
          %v1484 = vmul.f32 %v844, %v1284
          %v1485 = vmul.f32 %v845, %v1299
          %v1486 = vmul.f32 %v846, %v1314
          %v1487 = vmul.f32 %v847, %v1329
          %v1488 = vmul.f32 %v848, %v1344
          %v1489 = vmul.f32 %v849, %v1359
          %v1490 = vmul.f32 %v850, %v1374
          %v1491 = vmul.f32 %v851, %v1389
          %v1492 = vmul.f32 %v852, %v1404
          %v1493 = vmul.f32 %v853, %v1419
          %v1494 = vmul.f32 %v854, %v1434
          %v1495 = vmul.f32 %v855, %v1449
          %v1496 = vmul.f32 %v856, %v1464
          %1497 = vst.msk [vmem:[%s291] sm:$0xff] %vm470, %v1465
          %1498 = vst.msk [vmem:[%s291 + $0x8] sm:$0xff] %vm470, %v1466
          %1499 = vst.msk [vmem:[%s291 + $0x10] sm:$0xff] %vm470, %v1467
          %1500 = vst.msk [vmem:[%s291 + $0x18] sm:$0xff] %vm470, %v1468
          %1501 = vst.msk [vmem:[%s291 + $0x20] sm:$0xff] %vm470, %v1469
          %1502 = vst.msk [vmem:[%s291 + $0x28] sm:$0xff] %vm470, %v1470
          %1503 = vst.msk [vmem:[%s291 + $0x30] sm:$0xff] %vm470, %v1471
          %1504 = vst.msk [vmem:[%s291 + $0x38] sm:$0xff] %vm470, %v1472
          %1505 = vst.msk [vmem:[%s291 + $0x40] sm:$0xff] %vm470, %v1473
          %1506 = vst.msk [vmem:[%s291 + $0x48] sm:$0xff] %vm470, %v1474
          %1507 = vst.msk [vmem:[%s291 + $0x50] sm:$0xff] %vm470, %v1475
          %1508 = vst.msk [vmem:[%s291 + $0x58] sm:$0xff] %vm470, %v1476
          %1509 = vst.msk [vmem:[%s291 + $0x60] sm:$0xff] %vm470, %v1477
          %1510 = vst.msk [vmem:[%s291 + $0x68] sm:$0xff] %vm470, %v1478
          %1511 = vst.msk [vmem:[%s291 + $0x70] sm:$0xff] %vm470, %v1479
          %1512 = vst.msk [vmem:[%s291 + $0x78] sm:$0xff] %vm470, %v1480
          %1513 = vst.msk [vmem:[%s291 + $0x80] sm:$0xff] %vm470, %v1481
          %1514 = vst.msk [vmem:[%s291 + $0x88] sm:$0xff] %vm470, %v1482
          %1515 = vst.msk [vmem:[%s291 + $0x90] sm:$0xff] %vm470, %v1483
          %1516 = vst.msk [vmem:[%s291 + $0x98] sm:$0xff] %vm470, %v1484
          %1517 = vst.msk [vmem:[%s291 + $0xa0] sm:$0xff] %vm470, %v1485
          %1518 = vst.msk [vmem:[%s291 + $0xa8] sm:$0xff] %vm470, %v1486
          %1519 = vst.msk [vmem:[%s291 + $0xb0] sm:$0xff] %vm470, %v1487
          %1520 = vst.msk [vmem:[%s291 + $0xb8] sm:$0xff] %vm470, %v1488
          %1521 = vst.msk [vmem:[%s291 + $0xc0] sm:$0xff] %vm470, %v1489
          %1522 = vst.msk [vmem:[%s291 + $0xc8] sm:$0xff] %vm470, %v1490
          %1523 = vst.msk [vmem:[%s291 + $0xd0] sm:$0xff] %vm470, %v1491
          %1524 = vst.msk [vmem:[%s291 + $0xd8] sm:$0xff] %vm470, %v1492
          %1525 = vst.msk [vmem:[%s291 + $0xe0] sm:$0xff] %vm470, %v1493
          %1526 = vst.msk [vmem:[%s291 + $0xe8] sm:$0xff] %vm470, %v1494
          %1527 = vst.msk [vmem:[%s291 + $0xf0] sm:$0xff] %vm470, %v1495
          %1528 = vst.msk [vmem:[%s291 + $0xf8] sm:$0xff] %vm470, %v1496
        $region52: #{block_forward.1} parent=43 // pred_fallthru
          _
        %s1529 = sand.u32 %s183, 1
        %s1530 = scalar_lea.sflag [#allocation6], %s1529
        %s1531 = sand.u32 %s183, 1
        %s1532 = smul.addr %s1531, 256
        %s1533 = scalar_lea.vmem [#allocation5], %s1532
        // Predicated region
        $region53: #{block_forward.1} parent=43 // pred_check
          %p1534 = pneg %p193
        $region54: #{block_forward.1} parent=43 // pred_check_branch
          %1536 = sbr.rel (%p1534) target = $region56
        $region55: #{block_forward.1} parent=43 // pred_region
          %1538 = vsyncadd %s1530, 0
          %s1539 = smul.addr %s24, 32
          %s1540 = smul.addr %s1539, 8
          %s1541 = scalar_lea.hbm %s6, %s1540
          %s1542 = sshll.u32 %s1533, 4
          %s1543 = int_to_ptr.vmem [resolvable:$true] %s1542
          %s1544 = sshll.u32 %s1541, 4
          %s1545 = int_to_ptr.hbm [resolvable:$true] %s1544
          %1550 = dma.vmem_to_hbm [thread:$0]  %s1543, 4096, %s1545, %s1530, 128, 128, 8
        $region56: #{block_forward.1} parent=43 // pred_fallthru
          _
      $region44: #{block_forward.1} parent=5 // pred_fallthru
        _
      %p1551 = scmp.le.s32.totalorder 2, %s15
      // Predicated region
      $region57: #{block_forward.1} parent=5 // pred_check
        %p1552 = pneg %p1551
      $region58: #{block_forward.1} parent=5 // pred_check_branch
        %1554 = sbr.rel (%p1552) target = $region60
      $region59: #{block_forward.1} parent=5 // pred_region
        %s1555 = ssub.s32 %s15, 2
        // Predicated region
        $region61: #{block_forward.1} parent=59 // pred_check
          %p1556 = pneg %p199
        $region62: #{block_forward.1} parent=59 // pred_check_branch
          %1558 = sbr.rel (%p1556) target = $region64
        $region63: #{block_forward.1} parent=59 // pred_region
          %s1559 = sand.u32 %s184, 1
          %s1560 = scalar_lea.sflag [#allocation6], %s1559
          %s1561 = sand.u32 %s184, 1
          %s1562 = smul.addr %s1561, 256
          %s1563 = scalar_lea.vmem [#allocation5], %s1562
          %1565 = dma.done %s1560, 4096
        $region64: #{block_forward.1} parent=59 // pred_fallthru
          _
      $region60: #{block_forward.1} parent=5 // pred_fallthru
        _
    $region6: #{block_forward.1} parent=1 // loop_footer
      %s19 = sadd.s32 1, %s15
    $region7: #{block_forward.1} parent=1 // loop_footer_branch
      %14 = sbr.rel target = $region3
    $region8: #{block_forward.1} parent=1 // loop_exit
      _
    %1566 = vsyncpa [#allocation6], 1
    %s1567 = scalar_lea.sflag [#allocation6], 1
    %1568 = vsyncpa %s1567, 1

</llo_original>
